<compile_context>
chip_gen: v6e
topology: v6e:2x2x1
jax: 0.10.0
libtpu: 0.0.40
codegen_flags: <defaults>
</compile_context>

<pallas_src>
import functools
import math

import jax
import jax.numpy as jnp
from jax import lax
from jax.experimental import pallas as pl
from jax.experimental.pallas import tpu as pltpu

_LOG2 = math.log(2.0)


def _ssp(x):
    # ShiftedSoftplus(beta=1, shift=2), branch-free:
    #   softplus(x) = max(x, 0) + log(1 + exp(-|x|))
    return jnp.maximum(x, 0.0) + jnp.log(1.0 + jnp.exp(-jnp.abs(x))) - _LOG2


def _round_up(x, m):
    return ((x + m - 1) // m) * m


def _interaction_kernel(edge_ref, nsrc_ref, dst_ref,          # pipelined per edge tile
                        wn_ref, bn_ref, we1_ref, be1_ref,
                        we2_ref, be2_ref, wo1_ref, bo1_ref,
                        wp_ref, bp_ref,                        # resident (VMEM)
                        out_ref,                               # (Vp, Fp) resident output
                        agg_ref,                               # (Vp, Hp) f32 scratch
                        *, inv_max_neighbors):
    step = pl.program_id(0)
    n_steps = pl.num_programs(0)
    te = edge_ref.shape[0]
    vp = agg_ref.shape[0]

    # --- step 0: zero the scatter accumulator --------------------------------
    @pl.when(step == 0)
    def _():
        agg_ref[...] = jnp.zeros_like(agg_ref)

    # --- project_node applied to the pre-gathered source-node rows -----------
    hv_src = jnp.dot(nsrc_ref[...], wn_ref[...],
                     preferred_element_type=jnp.float32) + bn_ref[...]     # (TE, Hp)

    # --- project_edge: Linear -> SSP -> Linear -> SSP ------------------------
    he = _ssp(jnp.dot(edge_ref[...], we1_ref[...],
                      preferred_element_type=jnp.float32) + be1_ref[...])
    he = _ssp(jnp.dot(he.astype(jnp.bfloat16), we2_ref[...],
                      preferred_element_type=jnp.float32) + be2_ref[...])  # (TE, Hp)

    # --- u_mul_e --------------------------------------------------------------
    msg = hv_src * he                                                      # (TE, Hp) f32

    # --- scatter-add to destination nodes via one-hot matmul -----------------
    # dst is (1, TE) lane-dense int32; padded edges carry dst = -1 -> all-zero
    # one-hot column -> their message is dropped.
    dst = dst_ref[...]
    smat = (lax.broadcasted_iota(jnp.int32, (vp, te), 0) == dst
            ).astype(jnp.bfloat16)                                         # (Vp, TE)
    agg_ref[...] += jnp.dot(smat, msg.astype(jnp.bfloat16),
                            preferred_element_type=jnp.float32)            # (Vp, Hp)

    # --- last step: CFConv project_out, scale, Interaction.project_out -------
    @pl.when(step == n_steps - 1)
    def _():
        h = _ssp(jnp.dot(agg_ref[...].astype(jnp.bfloat16), wo1_ref[...],
                         preferred_element_type=jnp.float32) + bo1_ref[...])
        h = h * inv_max_neighbors
        out_ref[...] = (jnp.dot(h.astype(jnp.bfloat16), wp_ref[...],
                                preferred_element_type=jnp.float32)
                        + bp_ref[...]).astype(out_ref.dtype)


def interaction_forward(node_feats, edge_feats, src_ids, dst_ids, params,
                        max_neighbors):
    V, F = node_feats.shape
    E, Fe = edge_feats.shape
    H = params["Wn"].shape[1]

    LANE = 128
    Fp = _round_up(F, LANE)
    Hp = _round_up(H, LANE)
    Fep = _round_up(Fe, LANE)
    Vp = _round_up(V, 8)

    # Adaptive, lane-aligned edge tile (<= 1024, multiple of 128 so every
    # block shape satisfies the (8, 128) tiling rules for any number of tiles).
    TE_MAX = 1024
    n_tiles = max(1, -(-E // TE_MAX))
    TE = _round_up(max(1, -(-E // n_tiles)), LANE)
    Ep = TE * n_tiles

    def pad2(a, rows, cols, dtype):
        a = a.astype(dtype)
        return jnp.pad(a, ((0, rows - a.shape[0]), (0, cols - a.shape[1])))

    # XLA-side gather of source-node features per edge.  Padded edges reuse
    # node 0; they are killed in-kernel by their dst = -1 scatter column.
    src_p = jnp.zeros((Ep,), jnp.int32).at[:E].set(src_ids.astype(jnp.int32))
    nsrc_p = pad2(node_feats.astype(jnp.bfloat16)[src_p], Ep, Fp, jnp.bfloat16)

    edge_p = pad2(edge_feats, Ep, Fep, jnp.bfloat16)
    dst_p = jnp.full((1, Ep), -1, jnp.int32).at[0, :E].set(dst_ids.astype(jnp.int32))

    # Weights in bf16 (f32 MXU accumulation inside the kernel); biases stay f32.
    Wn = pad2(params["Wn"], Fp, Hp, jnp.bfloat16)
    bn = pad2(params["bn"], 1, Hp, jnp.float32)
    We1 = pad2(params["We1"], Fep, Hp, jnp.bfloat16)
    be1 = pad2(params["be1"], 1, Hp, jnp.float32)
    We2 = pad2(params["We2"], Hp, Hp, jnp.bfloat16)
    be2 = pad2(params["be2"], 1, Hp, jnp.float32)
    Wo1 = pad2(params["Wo1"], Hp, Fp, jnp.bfloat16)
    bo1 = pad2(params["bo1"], 1, Fp, jnp.float32)
    Wp_ = pad2(params["Wp"], Fp, Fp, jnp.bfloat16)
    bp = pad2(params["bp"], 1, Fp, jnp.float32)

    inputs = [edge_p, nsrc_p, dst_p,
              Wn, bn, We1, be1, We2, be2, Wo1, bo1, Wp_, bp]

    resident = pl.BlockSpec(memory_space=pltpu.MemorySpace.VMEM)
    in_specs = [
        pl.BlockSpec((TE, Fep), lambda e: (e, 0)),   # edge-feature tile
        pl.BlockSpec((TE, Fp), lambda e: (e, 0)),    # gathered src-node-feature tile
        pl.BlockSpec((1, TE), lambda e: (0, e)),     # dst ids (lane-dense)
    ] + [resident] * 10                              # weights / biases

    kernel = functools.partial(_interaction_kernel,
                               inv_max_neighbors=1.0 / float(max_neighbors))

    flops = 2 * (Ep * Fp * Hp                        # per-edge project_node of src rows
                 + Ep * (Fep * Hp + Hp * Hp)         # project_edge
                 + Ep * Vp * Hp                      # one-hot scatter-add
                 + Vp * Hp * Fp                      # CFConv project_out
                 + Vp * Fp * Fp)                     # Interaction.project_out
    transcendentals = 2 * (2 * Ep * Hp + Vp * Fp)    # exp + log per SSP element
    bytes_accessed = int(sum(int(a.size) * a.dtype.itemsize for a in inputs)
                         + Vp * Fp * 4)

    # Actual VMEM requirement (double-buffered edge tiles + resident weights +
    # accumulator + output + transient headroom), with 2x margin, capped at the
    # v7x 64 MiB budget so the same limit is valid on every generation.
    def _nbytes(shape, dt):
        return math.prod(shape) * jnp.dtype(dt).itemsize

    vmem_est = (
        2 * (_nbytes((TE, Fep), jnp.bfloat16) + _nbytes((TE, Fp), jnp.bfloat16)
             + _nbytes((8, TE), jnp.int32))
        + sum(int(a.size) * a.dtype.itemsize for a in inputs[3:])
        + 2 * _nbytes((Vp, Fp), jnp.float32)
        + _nbytes((Vp, Hp), jnp.float32)
        + _nbytes((Vp, TE), jnp.bfloat16)
        + 4 * _nbytes((TE, Hp), jnp.float32)
    )
    vmem_limit = int(min(64 * 1024 * 1024, max(32 * 1024 * 1024, 2 * vmem_est)))

    out_padded = pl.pallas_call(
        kernel,
        out_shape=jax.ShapeDtypeStruct((Vp, Fp), jnp.float32),
        grid=(n_tiles,),
        in_specs=in_specs,
        out_specs=pl.BlockSpec((Vp, Fp), lambda e: (0, 0)),
        scratch_shapes=[pltpu.VMEM((Vp, Hp), jnp.float32)],   # scatter accumulator
        compiler_params=pltpu.CompilerParams(
            dimension_semantics=("arbitrary",),
            vmem_limit_bytes=vmem_limit),
        cost_estimate=pl.CostEstimate(flops=int(flops),
                                      transcendentals=int(transcendentals),
                                      bytes_accessed=bytes_accessed),
    )(*inputs)

    return out_padded[:V, :F]


def _linear_params(key, fan_in, fan_out):
    # Mimic torch.nn.Linear default init: U(-1/sqrt(fan_in), 1/sqrt(fan_in)).
    kw, kb = jax.random.split(key)
    bound = 1.0 / math.sqrt(fan_in)
    W = jax.random.uniform(kw, (fan_in, fan_out), jnp.float32, -bound, bound)
    b = jax.random.uniform(kb, (1, fan_out), jnp.float32, -bound, bound)
    return W, b


def make_params(key, node_feats, edge_in_feats, hidden_feats):
    keys = jax.random.split(key, 5)
    Wn, bn = _linear_params(keys[0], node_feats, hidden_feats)       # project_node
    We1, be1 = _linear_params(keys[1], edge_in_feats, hidden_feats)  # project_edge[0]
    We2, be2 = _linear_params(keys[2], hidden_feats, hidden_feats)   # project_edge[2]
    Wo1, bo1 = _linear_params(keys[3], hidden_feats, node_feats)     # conv.project_out[0]
    Wp, bp = _linear_params(keys[4], node_feats, node_feats)         # Interaction.project_out
    return dict(Wn=Wn, bn=bn, We1=We1, be1=be1, We2=We2, be2=be2,
                Wo1=Wo1, bo1=bo1, Wp=Wp, bp=bp)


def reference_forward(node_feats, edge_feats, src_ids, dst_ids, params,
                      max_neighbors):
    hv = node_feats @ params["Wn"] + params["bn"]
    he = _ssp(edge_feats @ params["We1"] + params["be1"])
    he = _ssp(he @ params["We2"] + params["be2"])
    msg = hv[src_ids] * he
    agg = jnp.zeros_like(hv).at[dst_ids].add(msg)
    h = _ssp(agg @ params["Wo1"] + params["bo1"]) / max_neighbors
    return h @ params["Wp"] + params["bp"]


if __name__ == "__main__":
    V = 8           # number of nodes
    E = 16          # number of edges
    NODE_FEATS = 32
    EDGE_IN_FEATS = 16
    HIDDEN_FEATS = 32
    MAX_NEIGHBORS = 4

    key = jax.random.PRNGKey(0)
    k_node, k_edge, k_src, k_dst, k_param = jax.random.split(key, 5)

    node_feats = jax.random.normal(k_node, (V, NODE_FEATS), jnp.float32)
    edge_feats = jax.random.normal(k_edge, (E, EDGE_IN_FEATS), jnp.float32)
    src_ids = jax.random.randint(k_src, (E,), 0, V)
    dst_ids = jax.random.randint(k_dst, (E,), 0, V)

    params = make_params(k_param, NODE_FEATS, EDGE_IN_FEATS, HIDDEN_FEATS)

    out = jax.block_until_ready(
        interaction_forward(node_feats, edge_feats, src_ids, dst_ids,
                            params, MAX_NEIGHBORS))

    ref = reference_forward(node_feats, edge_feats, src_ids, dst_ids,
                            params, MAX_NEIGHBORS)
    assert out.shape == (V, NODE_FEATS)
    # bf16 matmul operands (f32 accumulation) -> widened tolerance vs f32 ref.
    assert jnp.allclose(out, ref, atol=5e-2, rtol=5e-2), \
        float(jnp.max(jnp.abs(out - ref)))

    print("KERNEL_OK")
</pallas_src>

<mosaic_0001>
module attributes {stable_mosaic.version = 11 : i64} {
  func.func @_interaction_kernel(%arg0: i32, %arg1: memref<128x128xbf16, #tpu.memory_space<vmem>>, %arg2: memref<128x128xbf16, #tpu.memory_space<vmem>>, %arg3: memref<1x128xi32, #tpu.memory_space<vmem>>, %arg4: memref<128x128xbf16, #tpu.memory_space<vmem>>, %arg5: memref<1x128xf32, #tpu.memory_space<vmem>>, %arg6: memref<128x128xbf16, #tpu.memory_space<vmem>>, %arg7: memref<1x128xf32, #tpu.memory_space<vmem>>, %arg8: memref<128x128xbf16, #tpu.memory_space<vmem>>, %arg9: memref<1x128xf32, #tpu.memory_space<vmem>>, %arg10: memref<128x128xbf16, #tpu.memory_space<vmem>>, %arg11: memref<1x128xf32, #tpu.memory_space<vmem>>, %arg12: memref<128x128xbf16, #tpu.memory_space<vmem>>, %arg13: memref<1x128xf32, #tpu.memory_space<vmem>>, %arg14: memref<8x128xf32, #tpu.memory_space<vmem>>, %arg15: memref<8x128xf32, #tpu.memory_space<vmem>>) attributes {dimension_semantics = [#tpu.dimension_semantics<arbitrary>], iteration_bounds = array<i64: 1>, scalar_prefetch = 0 : i64, scratch_operands = 1 : i64, tpu.core_type = #tpu.core_type<tc>, window_params = [{transform_indices = @transform_0, window_bounds = array<i64: 128, 128>}, {transform_indices = @transform_1, window_bounds = array<i64: 128, 128>}, {transform_indices = @transform_2, window_bounds = array<i64: 1, 128>}, {pipeline_mode = #tpu.pipeline_mode<synchronous>, transform_indices = @transform_3, window_bounds = array<i64: 128, 128>}, {pipeline_mode = #tpu.pipeline_mode<synchronous>, transform_indices = @transform_4, window_bounds = array<i64: 1, 128>}, {pipeline_mode = #tpu.pipeline_mode<synchronous>, transform_indices = @transform_5, window_bounds = array<i64: 128, 128>}, {pipeline_mode = #tpu.pipeline_mode<synchronous>, transform_indices = @transform_6, window_bounds = array<i64: 1, 128>}, {pipeline_mode = #tpu.pipeline_mode<synchronous>, transform_indices = @transform_7, window_bounds = array<i64: 128, 128>}, {pipeline_mode = #tpu.pipeline_mode<synchronous>, transform_indices = @transform_8, window_bounds = array<i64: 1, 128>}, {pipeline_mode = #tpu.pipeline_mode<synchronous>, transform_indices = @transform_9, window_bounds = array<i64: 128, 128>}, {pipeline_mode = #tpu.pipeline_mode<synchronous>, transform_indices = @transform_10, window_bounds = array<i64: 1, 128>}, {pipeline_mode = #tpu.pipeline_mode<synchronous>, transform_indices = @transform_11, window_bounds = array<i64: 128, 128>}, {pipeline_mode = #tpu.pipeline_mode<synchronous>, transform_indices = @transform_12, window_bounds = array<i64: 1, 128>}, {pipeline_mode = #tpu.pipeline_mode<synchronous>, transform_indices = @transform_13, window_bounds = array<i64: 8, 128>}]} {
    %c0_i32 = arith.constant 0 : i32
    %0 = arith.cmpi eq, %arg0, %c0_i32 : i32
    %1 = arith.extui %0 : i1 to i32
    %c0_i32_0 = arith.constant 0 : i32
    %2 = arith.cmpi ne, %1, %c0_i32_0 : i32
    scf.if %2 {
      %cst_35 = arith.constant 0.000000e+00 : f32
      %61 = vector.broadcast %cst_35 : f32 to vector<8x128xf32>
      %c0_36 = arith.constant 0 : index
      %c0_37 = arith.constant 0 : index
      %62 = vector.load %arg15[%c0_36, %c0_37] : memref<8x128xf32, #tpu.memory_space<vmem>>, vector<8x128xf32>
      tpu.vector_store %arg15[%c0_36, %c0_37], %61 {strides = array<i32>} : memref<8x128xf32, #tpu.memory_space<vmem>>, vector<8x128xf32>,
    } else {
    }
    %c0 = arith.constant 0 : index
    %c0_1 = arith.constant 0 : index
    %3 = vector.load %arg2[%c0, %c0_1] : memref<128x128xbf16, #tpu.memory_space<vmem>>, vector<128x128xbf16>
    %c0_2 = arith.constant 0 : index
    %c0_3 = arith.constant 0 : index
    %4 = vector.load %arg4[%c0_2, %c0_3] : memref<128x128xbf16, #tpu.memory_space<vmem>>, vector<128x128xbf16>
    %cst = arith.constant dense<0.000000e+00> : vector<128x128xf32>
    %5 = tpu.matmul %3, %4, %cst {dimension_numbers = #tpu.dot_dimension_numbers<[1], [0], [0], [1], [0, 0, 1, 1], [], []>} : vector<128x128xbf16>, vector<128x128xbf16>, vector<128x128xf32> -> vector<128x128xf32>
    %c0_4 = arith.constant 0 : index
    %c0_5 = arith.constant 0 : index
    %6 = vector.load %arg5[%c0_4, %c0_5] : memref<1x128xf32, #tpu.memory_space<vmem>>, vector<1x128xf32>
    %7 = vector.broadcast %6 : vector<1x128xf32> to vector<128x128xf32>
    %8 = arith.addf %5, %7 : vector<128x128xf32>
    %c0_6 = arith.constant 0 : index
    %c0_7 = arith.constant 0 : index
    %9 = vector.load %arg1[%c0_6, %c0_7] : memref<128x128xbf16, #tpu.memory_space<vmem>>, vector<128x128xbf16>
    %c0_8 = arith.constant 0 : index
    %c0_9 = arith.constant 0 : index
    %10 = vector.load %arg6[%c0_8, %c0_9] : memref<128x128xbf16, #tpu.memory_space<vmem>>, vector<128x128xbf16>
    %cst_10 = arith.constant dense<0.000000e+00> : vector<128x128xf32>
    %11 = tpu.matmul %9, %10, %cst_10 {dimension_numbers = #tpu.dot_dimension_numbers<[1], [0], [0], [1], [0, 0, 1, 1], [], []>} : vector<128x128xbf16>, vector<128x128xbf16>, vector<128x128xf32> -> vector<128x128xf32>
    %c0_11 = arith.constant 0 : index
    %c0_12 = arith.constant 0 : index
    %12 = vector.load %arg7[%c0_11, %c0_12] : memref<1x128xf32, #tpu.memory_space<vmem>>, vector<1x128xf32>
    %13 = vector.broadcast %12 : vector<1x128xf32> to vector<128x128xf32>
    %14 = arith.addf %11, %13 : vector<128x128xf32>
    %cst_13 = arith.constant 0.000000e+00 : f32
    %15 = vector.broadcast %cst_13 : f32 to vector<128x128xf32>
    %16 = arith.maximumf %14, %15 : vector<128x128xf32>
    %17 = math.absf %14 : vector<128x128xf32>
    %cst_14 = arith.constant 0.000000e+00 : f32
    %18 = vector.broadcast %cst_14 : f32 to vector<128x128xf32>
    %19 = arith.subf %18, %17 : vector<128x128xf32>
    %20 = math.exp %19 : vector<128x128xf32>
    %cst_15 = arith.constant 1.000000e+00 : f32
    %21 = vector.broadcast %cst_15 : f32 to vector<128x128xf32>
    %22 = arith.addf %21, %20 : vector<128x128xf32>
    %23 = math.log %22 : vector<128x128xf32>
    %24 = arith.addf %16, %23 : vector<128x128xf32>
    %cst_16 = arith.constant 0.693147182 : f32
    %25 = vector.broadcast %cst_16 : f32 to vector<128x128xf32>
    %26 = arith.subf %24, %25 : vector<128x128xf32>
    %27 = arith.truncf %26 : vector<128x128xf32> to vector<128x128xbf16>
    %c0_17 = arith.constant 0 : index
    %c0_18 = arith.constant 0 : index
    %28 = vector.load %arg8[%c0_17, %c0_18] : memref<128x128xbf16, #tpu.memory_space<vmem>>, vector<128x128xbf16>
    %cst_19 = arith.constant dense<0.000000e+00> : vector<128x128xf32>
    %29 = tpu.matmul %27, %28, %cst_19 {dimension_numbers = #tpu.dot_dimension_numbers<[1], [0], [0], [1], [0, 0, 1, 1], [], []>} : vector<128x128xbf16>, vector<128x128xbf16>, vector<128x128xf32> -> vector<128x128xf32>
    %c0_20 = arith.constant 0 : index
    %c0_21 = arith.constant 0 : index
    %30 = vector.load %arg9[%c0_20, %c0_21] : memref<1x128xf32, #tpu.memory_space<vmem>>, vector<1x128xf32>
    %31 = vector.broadcast %30 : vector<1x128xf32> to vector<128x128xf32>
    %32 = arith.addf %29, %31 : vector<128x128xf32>
    %cst_22 = arith.constant 0.000000e+00 : f32
    %33 = vector.broadcast %cst_22 : f32 to vector<128x128xf32>
    %34 = arith.maximumf %32, %33 : vector<128x128xf32>
    %35 = math.absf %32 : vector<128x128xf32>
    %cst_23 = arith.constant 0.000000e+00 : f32
    %36 = vector.broadcast %cst_23 : f32 to vector<128x128xf32>
    %37 = arith.subf %36, %35 : vector<128x128xf32>
    %38 = math.exp %37 : vector<128x128xf32>
    %cst_24 = arith.constant 1.000000e+00 : f32
    %39 = vector.broadcast %cst_24 : f32 to vector<128x128xf32>
    %40 = arith.addf %39, %38 : vector<128x128xf32>
    %41 = math.log %40 : vector<128x128xf32>
    %42 = arith.addf %34, %41 : vector<128x128xf32>
    %cst_25 = arith.constant 0.693147182 : f32
    %43 = vector.broadcast %cst_25 : f32 to vector<128x128xf32>
    %44 = arith.subf %42, %43 : vector<128x128xf32>
    %45 = arith.mulf %8, %44 : vector<128x128xf32>
    %c0_26 = arith.constant 0 : index
    %c0_27 = arith.constant 0 : index
    %46 = vector.load %arg3[%c0_26, %c0_27] : memref<1x128xi32, #tpu.memory_space<vmem>>, vector<1x128xi32>
    %47 = tpu.iota {dimensions = array<i32: 0>} : vector<8x128xi32>
    %48 = vector.broadcast %46 : vector<1x128xi32> to vector<8x128xi32>
    %49 = arith.cmpi eq, %47, %48 : vector<8x128xi32>
    %50 = arith.extui %49 : vector<8x128xi1> to vector<8x128xi32>
    %51 = arith.sitofp %50 : vector<8x128xi32> to vector<8x128xf32>
    %52 = arith.truncf %51 : vector<8x128xf32> to vector<8x128xbf16>
    %c0_28 = arith.constant 0 : index
    %c0_29 = arith.constant 0 : index
    %53 = vector.load %arg15[%c0_28, %c0_29] : memref<8x128xf32, #tpu.memory_space<vmem>>, vector<8x128xf32>
    %54 = arith.truncf %45 : vector<128x128xf32> to vector<128x128xbf16>
    %cst_30 = arith.constant dense<0.000000e+00> : vector<8x128xf32>
    %55 = tpu.matmul %52, %54, %cst_30 {dimension_numbers = #tpu.dot_dimension_numbers<[1], [0], [0], [1], [0, 0, 1, 1], [], []>} : vector<8x128xbf16>, vector<128x128xbf16>, vector<8x128xf32> -> vector<8x128xf32>
    %56 = arith.addf %53, %55 : vector<8x128xf32>
    %c0_31 = arith.constant 0 : index
    %c0_32 = arith.constant 0 : index
    %57 = vector.load %arg15[%c0_31, %c0_32] : memref<8x128xf32, #tpu.memory_space<vmem>>, vector<8x128xf32>
    tpu.vector_store %arg15[%c0_31, %c0_32], %56 {strides = array<i32>} : memref<8x128xf32, #tpu.memory_space<vmem>>, vector<8x128xf32>,
    %c0_i32_33 = arith.constant 0 : i32
    %58 = arith.cmpi eq, %arg0, %c0_i32_33 : i32
    %59 = arith.extui %58 : i1 to i32
    %c0_i32_34 = arith.constant 0 : i32
    %60 = arith.cmpi ne, %59, %c0_i32_34 : i32
    scf.if %60 {
      %c0_35 = arith.constant 0 : index
      %c0_36 = arith.constant 0 : index
      %61 = vector.load %arg15[%c0_35, %c0_36] : memref<8x128xf32, #tpu.memory_space<vmem>>, vector<8x128xf32>
      %62 = arith.truncf %61 : vector<8x128xf32> to vector<8x128xbf16>
      %c0_37 = arith.constant 0 : index
      %c0_38 = arith.constant 0 : index
      %63 = vector.load %arg10[%c0_37, %c0_38] : memref<128x128xbf16, #tpu.memory_space<vmem>>, vector<128x128xbf16>
      %cst_39 = arith.constant dense<0.000000e+00> : vector<8x128xf32>
      %64 = tpu.matmul %62, %63, %cst_39 {dimension_numbers = #tpu.dot_dimension_numbers<[1], [0], [0], [1], [0, 0, 1, 1], [], []>} : vector<8x128xbf16>, vector<128x128xbf16>, vector<8x128xf32> -> vector<8x128xf32>
      %c0_40 = arith.constant 0 : index
      %c0_41 = arith.constant 0 : index
      %65 = vector.load %arg11[%c0_40, %c0_41] : memref<1x128xf32, #tpu.memory_space<vmem>>, vector<1x128xf32>
      %66 = vector.broadcast %65 : vector<1x128xf32> to vector<8x128xf32>
      %67 = arith.addf %64, %66 : vector<8x128xf32>
      %cst_42 = arith.constant 0.000000e+00 : f32
      %68 = vector.broadcast %cst_42 : f32 to vector<8x128xf32>
      %69 = arith.maximumf %67, %68 : vector<8x128xf32>
      %70 = math.absf %67 : vector<8x128xf32>
      %cst_43 = arith.constant 0.000000e+00 : f32
      %71 = vector.broadcast %cst_43 : f32 to vector<8x128xf32>
      %72 = arith.subf %71, %70 : vector<8x128xf32>
      %73 = math.exp %72 : vector<8x128xf32>
      %cst_44 = arith.constant 1.000000e+00 : f32
      %74 = vector.broadcast %cst_44 : f32 to vector<8x128xf32>
      %75 = arith.addf %74, %73 : vector<8x128xf32>
      %76 = math.log %75 : vector<8x128xf32>
      %77 = arith.addf %69, %76 : vector<8x128xf32>
      %cst_45 = arith.constant 0.693147182 : f32
      %78 = vector.broadcast %cst_45 : f32 to vector<8x128xf32>
      %79 = arith.subf %77, %78 : vector<8x128xf32>
      %cst_46 = arith.constant 2.500000e-01 : f32
      %80 = vector.broadcast %cst_46 : f32 to vector<8x128xf32>
      %81 = arith.mulf %79, %80 : vector<8x128xf32>
      %82 = arith.truncf %81 : vector<8x128xf32> to vector<8x128xbf16>
      %c0_47 = arith.constant 0 : index
      %c0_48 = arith.constant 0 : index
      %83 = vector.load %arg12[%c0_47, %c0_48] : memref<128x128xbf16, #tpu.memory_space<vmem>>, vector<128x128xbf16>
      %cst_49 = arith.constant dense<0.000000e+00> : vector<8x128xf32>
      %84 = tpu.matmul %82, %83, %cst_49 {dimension_numbers = #tpu.dot_dimension_numbers<[1], [0], [0], [1], [0, 0, 1, 1], [], []>} : vector<8x128xbf16>, vector<128x128xbf16>, vector<8x128xf32> -> vector<8x128xf32>
      %c0_50 = arith.constant 0 : index
      %c0_51 = arith.constant 0 : index
      %85 = vector.load %arg13[%c0_50, %c0_51] : memref<1x128xf32, #tpu.memory_space<vmem>>, vector<1x128xf32>
      %86 = vector.broadcast %85 : vector<1x128xf32> to vector<8x128xf32>
      %87 = arith.addf %84, %86 : vector<8x128xf32>
      %c0_52 = arith.constant 0 : index
      %c0_53 = arith.constant 0 : index
      %88 = vector.load %arg14[%c0_52, %c0_53] : memref<8x128xf32, #tpu.memory_space<vmem>>, vector<8x128xf32>
      tpu.vector_store %arg14[%c0_52, %c0_53], %87 {strides = array<i32>} : memref<8x128xf32, #tpu.memory_space<vmem>>, vector<8x128xf32>,
    } else {
    }
    return
  }
  func.func @transform_0(%arg0: i32) -> (i32, i32) {
    %c0_i32 = arith.constant 0 : i32
    %c0_i32_0 = arith.constant 0 : i32
    return %arg0, %c0_i32 : i32, i32
  }
  func.func @transform_1(%arg0: i32) -> (i32, i32) {
    %c0_i32 = arith.constant 0 : i32
    %c0_i32_0 = arith.constant 0 : i32
    return %arg0, %c0_i32 : i32, i32
  }
  func.func @transform_2(%arg0: i32) -> (i32, i32) {
    %c0_i32 = arith.constant 0 : i32
    %c0_i32_0 = arith.constant 0 : i32
    return %c0_i32, %arg0 : i32, i32
  }
  func.func @transform_3(%arg0: i32) -> (i32, i32) {
    %c0_i32 = arith.constant 0 : i32
    %c0_i32_0 = arith.constant 0 : i32
    %c0_i32_1 = arith.constant 0 : i32
    return %c0_i32, %c0_i32_0 : i32, i32
  }
  func.func @transform_4(%arg0: i32) -> (i32, i32) {
    %c0_i32 = arith.constant 0 : i32
    %c0_i32_0 = arith.constant 0 : i32
    %c0_i32_1 = arith.constant 0 : i32
    return %c0_i32, %c0_i32_0 : i32, i32
  }
  func.func @transform_5(%arg0: i32) -> (i32, i32) {
    %c0_i32 = arith.constant 0 : i32
    %c0_i32_0 = arith.constant 0 : i32
    %c0_i32_1 = arith.constant 0 : i32
    return %c0_i32, %c0_i32_0 : i32, i32
  }
  func.func @transform_6(%arg0: i32) -> (i32, i32) {
    %c0_i32 = arith.constant 0 : i32
    %c0_i32_0 = arith.constant 0 : i32
    %c0_i32_1 = arith.constant 0 : i32
    return %c0_i32, %c0_i32_0 : i32, i32
  }
  func.func @transform_7(%arg0: i32) -> (i32, i32) {
    %c0_i32 = arith.constant 0 : i32
    %c0_i32_0 = arith.constant 0 : i32
    %c0_i32_1 = arith.constant 0 : i32
    return %c0_i32, %c0_i32_0 : i32, i32
  }
  func.func @transform_8(%arg0: i32) -> (i32, i32) {
    %c0_i32 = arith.constant 0 : i32
    %c0_i32_0 = arith.constant 0 : i32
    %c0_i32_1 = arith.constant 0 : i32
    return %c0_i32, %c0_i32_0 : i32, i32
  }
  func.func @transform_9(%arg0: i32) -> (i32, i32) {
    %c0_i32 = arith.constant 0 : i32
    %c0_i32_0 = arith.constant 0 : i32
    %c0_i32_1 = arith.constant 0 : i32
    return %c0_i32, %c0_i32_0 : i32, i32
  }
  func.func @transform_10(%arg0: i32) -> (i32, i32) {
    %c0_i32 = arith.constant 0 : i32
    %c0_i32_0 = arith.constant 0 : i32
    %c0_i32_1 = arith.constant 0 : i32
    return %c0_i32, %c0_i32_0 : i32, i32
  }
  func.func @transform_11(%arg0: i32) -> (i32, i32) {
    %c0_i32 = arith.constant 0 : i32
    %c0_i32_0 = arith.constant 0 : i32
    %c0_i32_1 = arith.constant 0 : i32
    return %c0_i32, %c0_i32_0 : i32, i32
  }
  func.func @transform_12(%arg0: i32) -> (i32, i32) {
    %c0_i32 = arith.constant 0 : i32
    %c0_i32_0 = arith.constant 0 : i32
    %c0_i32_1 = arith.constant 0 : i32
    return %c0_i32, %c0_i32_0 : i32, i32
  }
  func.func @transform_13(%arg0: i32) -> (i32, i32) {
    %c0_i32 = arith.constant 0 : i32
    %c0_i32_0 = arith.constant 0 : i32
    %c0_i32_1 = arith.constant 0 : i32
    return %c0_i32, %c0_i32_0 : i32, i32
  }
}

</mosaic_0001>

<llo_original>
// kernel: tpu_custom_call.1
$region0: #{tpu_custom_call.1}
  #allocation0 [shape = 'u32[]', space=smem, size = 0x4, offset = 0x4, fixed_abs, tag = 'smem constant byte address 0x4 - core index']
  #allocation1 [shape = 'u32[144,128]{1,0:T(1,128)}', space=vmem, size = 0x12000, scoped, tag = 'internal scratch']
  #allocation2 [shape = 'f32[8,128]{1,0:T(8,128)}', space=vmem, size = 0x1000, scoped, tag = 'scratch operand']
  %s0 = inlined_call_operand.hbm [shape: bf16[128,128], index: 0, kind: input, shape index: {}]
  %s1 = inlined_call_operand.hbm [shape: bf16[128,128], index: 1, kind: input, shape index: {}]
  %s2 = inlined_call_operand.vmem [shape: s32[1,128], index: 2, kind: input, shape index: {}]
  %s3 = inlined_call_operand.hbm [shape: bf16[128,128], index: 3, kind: input, shape index: {}]
  %s4 = inlined_call_operand.vmem [shape: f32[1,128], index: 4, kind: input, shape index: {}]
  %s5 = inlined_call_operand.hbm [shape: bf16[128,128], index: 5, kind: input, shape index: {}]
  %s6 = inlined_call_operand.vmem [shape: f32[1,128], index: 6, kind: input, shape index: {}]
  %s7 = inlined_call_operand.hbm [shape: bf16[128,128], index: 7, kind: input, shape index: {}]
  %s8 = inlined_call_operand.vmem [shape: f32[1,128], index: 8, kind: input, shape index: {}]
  %s9 = inlined_call_operand.hbm [shape: bf16[128,128], index: 9, kind: input, shape index: {}]
  %s10 = inlined_call_operand.vmem [shape: f32[1,128], index: 10, kind: input, shape index: {}]
  %s11 = inlined_call_operand.hbm [shape: bf16[128,128], index: 11, kind: input, shape index: {}]
  %s12 = inlined_call_operand.vmem [shape: f32[1,128], index: 12, kind: input, shape index: {}]
  %s13 = inlined_call_operand.hbm [shape: f32[8,128], index: 13, kind: output, shape index: {}]
  %s14 = sld [smem:[#allocation0]]
  $region98: #{tpu_custom_call.1} parent=0
    _
  %s16 = ssub.s32 1, %s14
  %s17 = scalar_select 0, %s16, %s14
  $region1: #{tpu_custom_call.1} parent=0
    #allocation3 [shape = 'u8[32768]{0}', space=vmem, size = 0x8000, scoped, tag = 'input window, operand 0, single buffered']
    #allocation4 [shape = 's32[1]{0}', space=sflag, size = 0x4, scoped, tag = 'scoped memory for tpu_custom_call.1']
    #allocation5 [shape = 's32[1]{0}', space=sflag, size = 0x4, scoped, tag = 'scoped memory for tpu_custom_call.1']
    #allocation6 [shape = 'u8[32768]{0}', space=vmem, size = 0x8000, scoped, tag = 'input window, operand 1, single buffered']
    #allocation7 [shape = 's32[1]{0}', space=sflag, size = 0x4, scoped, tag = 'scoped memory for tpu_custom_call.1']
    #allocation8 [shape = 'u8[32768]{0}', space=vmem, size = 0x8000, scoped, tag = 'input window, operand 3, single buffered']
    #allocation9 [shape = 'u8[32768]{0}', space=vmem, size = 0x8000, scoped, tag = 'input window, operand 5, single buffered']
    #allocation10 [shape = 's32[1]{0}', space=sflag, size = 0x4, scoped, tag = 'scoped memory for tpu_custom_call.1']
    #allocation11 [shape = 'u8[32768]{0}', space=vmem, size = 0x8000, scoped, tag = 'input window, operand 7, single buffered']
    #allocation12 [shape = 'u8[32768]{0}', space=vmem, size = 0x8000, scoped, tag = 'input window, operand 9, single buffered']
    #allocation13 [shape = 's32[1]{0}', space=sflag, size = 0x4, scoped, tag = 'scoped memory for tpu_custom_call.1']
    #allocation14 [shape = 'u8[32768]{0}', space=vmem, size = 0x8000, scoped, tag = 'input window, operand 11, single buffered']
    #allocation15 [shape = 'u8[4096]{0}', space=vmem, size = 0x1000, scoped, tag = 'output window, operand 0, single buffered']
    %18 = vsyncpa [#allocation4], 0
    %19 = vsyncpa [#allocation7], 0
    %20 = vsyncpa [#allocation10], 0
    %21 = vsyncpa [#allocation13], 0
    %22 = vsyncpa [#allocation5], 0
    // Predicated region
    $region2: #{tpu_custom_call.1} parent=1 // pred_check
      _
    $region3: #{tpu_custom_call.1} parent=1 // pred_check_branch
      %24 = sbr.rel (0) target = $region5
    $region4: #{tpu_custom_call.1} parent=1 // pred_region
      %s26 = ssub.s32 1024, 1024
      %27 = vsyncadd [#allocation4], %s26
      %s28 = sshll.u32 [#allocation3], 4
      %s29 = int_to_ptr.vmem [resolvable:$true] %s28
      %34 = dma.hbm_to_vmem [thread:$0]  %s0, 1024, %s29, [#allocation4], 64, 64, 4
    $region5: #{tpu_custom_call.1} parent=1 // pred_fallthru
      _
    // Predicated region
    $region6: #{tpu_custom_call.1} parent=1 // pred_check
      _
    $region7: #{tpu_custom_call.1} parent=1 // pred_check_branch
      %36 = sbr.rel (0) target = $region9
    $region8: #{tpu_custom_call.1} parent=1 // pred_region
      %s38 = ssub.s32 1024, 1024
      %39 = vsyncadd [#allocation7], %s38
      %s40 = sshll.u32 [#allocation6], 4
      %s41 = int_to_ptr.vmem [resolvable:$true] %s40
      %46 = dma.hbm_to_vmem [thread:$0]  %s1, 1024, %s41, [#allocation7], 64, 64, 4
    $region9: #{tpu_custom_call.1} parent=1 // pred_fallthru
      _
    // Predicated region
    $region10: #{tpu_custom_call.1} parent=1 // pred_check
      _
    $region11: #{tpu_custom_call.1} parent=1 // pred_check_branch
      %48 = sbr.rel (0) target = $region13
    $region12: #{tpu_custom_call.1} parent=1 // pred_region
      _
    $region13: #{tpu_custom_call.1} parent=1 // pred_fallthru
      _
    // Predicated region
    $region14: #{tpu_custom_call.1} parent=1 // pred_check
      _
    $region15: #{tpu_custom_call.1} parent=1 // pred_check_branch
      %50 = sbr.rel (0) target = $region17
    $region16: #{tpu_custom_call.1} parent=1 // pred_region
      %s52 = ssub.s32 1024, 1024
      %53 = vsyncadd [#allocation7], %s52
      %s54 = sshll.u32 [#allocation8], 4
      %s55 = int_to_ptr.vmem [resolvable:$true] %s54
      %60 = dma.hbm_to_vmem [thread:$0]  %s3, 1024, %s55, [#allocation7], 64, 64, 4
    $region17: #{tpu_custom_call.1} parent=1 // pred_fallthru
      _
    // Predicated region
    $region18: #{tpu_custom_call.1} parent=1 // pred_check
      _
    $region19: #{tpu_custom_call.1} parent=1 // pred_check_branch
      %62 = sbr.rel (0) target = $region21
    $region20: #{tpu_custom_call.1} parent=1 // pred_region
      _
    $region21: #{tpu_custom_call.1} parent=1 // pred_fallthru
      _
    // Predicated region
    $region22: #{tpu_custom_call.1} parent=1 // pred_check
      _
    $region23: #{tpu_custom_call.1} parent=1 // pred_check_branch
      %64 = sbr.rel (0) target = $region25
    $region24: #{tpu_custom_call.1} parent=1 // pred_region
      %s66 = ssub.s32 1024, 1024
      %67 = vsyncadd [#allocation10], %s66
      %s68 = sshll.u32 [#allocation9], 4
      %s69 = int_to_ptr.vmem [resolvable:$true] %s68
      %74 = dma.hbm_to_vmem [thread:$0]  %s5, 1024, %s69, [#allocation10], 64, 64, 4
    $region25: #{tpu_custom_call.1} parent=1 // pred_fallthru
      _
    // Predicated region
    $region26: #{tpu_custom_call.1} parent=1 // pred_check
      _
    $region27: #{tpu_custom_call.1} parent=1 // pred_check_branch
      %76 = sbr.rel (0) target = $region29
    $region28: #{tpu_custom_call.1} parent=1 // pred_region
      _
    $region29: #{tpu_custom_call.1} parent=1 // pred_fallthru
      _
    // Predicated region
    $region30: #{tpu_custom_call.1} parent=1 // pred_check
      _
    $region31: #{tpu_custom_call.1} parent=1 // pred_check_branch
      %78 = sbr.rel (0) target = $region33
    $region32: #{tpu_custom_call.1} parent=1 // pred_region
      %s80 = ssub.s32 1024, 1024
      %81 = vsyncadd [#allocation10], %s80
      %s82 = sshll.u32 [#allocation11], 4
      %s83 = int_to_ptr.vmem [resolvable:$true] %s82
      %88 = dma.hbm_to_vmem [thread:$0]  %s7, 1024, %s83, [#allocation10], 64, 64, 4
    $region33: #{tpu_custom_call.1} parent=1 // pred_fallthru
      _
    // Predicated region
    $region34: #{tpu_custom_call.1} parent=1 // pred_check
      _
    $region35: #{tpu_custom_call.1} parent=1 // pred_check_branch
      %90 = sbr.rel (0) target = $region37
    $region36: #{tpu_custom_call.1} parent=1 // pred_region
      _
    $region37: #{tpu_custom_call.1} parent=1 // pred_fallthru
      _
    // Predicated region
    $region38: #{tpu_custom_call.1} parent=1 // pred_check
      _
    $region39: #{tpu_custom_call.1} parent=1 // pred_check_branch
      %92 = sbr.rel (0) target = $region41
    $region40: #{tpu_custom_call.1} parent=1 // pred_region
      %s94 = ssub.s32 1024, 1024
      %95 = vsyncadd [#allocation13], %s94
      %s96 = sshll.u32 [#allocation12], 4
      %s97 = int_to_ptr.vmem [resolvable:$true] %s96
      %102 = dma.hbm_to_vmem [thread:$0]  %s9, 1024, %s97, [#allocation13], 64, 64, 4
    $region41: #{tpu_custom_call.1} parent=1 // pred_fallthru
      _
    // Predicated region
    $region42: #{tpu_custom_call.1} parent=1 // pred_check
      _
    $region43: #{tpu_custom_call.1} parent=1 // pred_check_branch
      %104 = sbr.rel (0) target = $region45
    $region44: #{tpu_custom_call.1} parent=1 // pred_region
      _
    $region45: #{tpu_custom_call.1} parent=1 // pred_fallthru
      _
    // Predicated region
    $region46: #{tpu_custom_call.1} parent=1 // pred_check
      _
    $region47: #{tpu_custom_call.1} parent=1 // pred_check_branch
      %106 = sbr.rel (0) target = $region49
    $region48: #{tpu_custom_call.1} parent=1 // pred_region
      %s108 = ssub.s32 1024, 1024
      %109 = vsyncadd [#allocation13], %s108
      %s110 = sshll.u32 [#allocation14], 4
      %s111 = int_to_ptr.vmem [resolvable:$true] %s110
      %116 = dma.hbm_to_vmem [thread:$0]  %s11, 1024, %s111, [#allocation13], 64, 64, 4
    $region49: #{tpu_custom_call.1} parent=1 // pred_fallthru
      _
    // Predicated region
    $region50: #{tpu_custom_call.1} parent=1 // pred_check
      _
    $region51: #{tpu_custom_call.1} parent=1 // pred_check_branch
      %118 = sbr.rel (0) target = $region53
    $region52: #{tpu_custom_call.1} parent=1 // pred_region
      _
    $region53: #{tpu_custom_call.1} parent=1 // pred_fallthru
      _
    // Predicated region
    $region54: #{tpu_custom_call.1} parent=1 // pred_check
      _
    $region55: #{tpu_custom_call.1} parent=1 // pred_check_branch
      %120 = sbr.rel (0) target = $region57
    $region56: #{tpu_custom_call.1} parent=1 // pred_region
      %121 = dma.done [#allocation4], 1024
    $region57: #{tpu_custom_call.1} parent=1 // pred_fallthru
      _
    // Predicated region
    $region58: #{tpu_custom_call.1} parent=1 // pred_check
      _
    $region59: #{tpu_custom_call.1} parent=1 // pred_check_branch
      %123 = sbr.rel (0) target = $region61
    $region60: #{tpu_custom_call.1} parent=1 // pred_region
      %124 = dma.done [#allocation7], 1024
    $region61: #{tpu_custom_call.1} parent=1 // pred_fallthru
      _
    // Predicated region
    $region62: #{tpu_custom_call.1} parent=1 // pred_check
      _
    $region63: #{tpu_custom_call.1} parent=1 // pred_check_branch
      %126 = sbr.rel (0) target = $region65
    $region64: #{tpu_custom_call.1} parent=1 // pred_region
      %127 = dma.done [#allocation7], 1024
    $region65: #{tpu_custom_call.1} parent=1 // pred_fallthru
      _
    // Predicated region
    $region66: #{tpu_custom_call.1} parent=1 // pred_check
      _
    $region67: #{tpu_custom_call.1} parent=1 // pred_check_branch
      %129 = sbr.rel (0) target = $region69
    $region68: #{tpu_custom_call.1} parent=1 // pred_region
      %130 = dma.done [#allocation10], 1024
    $region69: #{tpu_custom_call.1} parent=1 // pred_fallthru
      _
    // Predicated region
    $region70: #{tpu_custom_call.1} parent=1 // pred_check
      _
    $region71: #{tpu_custom_call.1} parent=1 // pred_check_branch
      %132 = sbr.rel (0) target = $region73
    $region72: #{tpu_custom_call.1} parent=1 // pred_region
      %133 = dma.done [#allocation10], 1024
    $region73: #{tpu_custom_call.1} parent=1 // pred_fallthru
      _
    // Predicated region
    $region74: #{tpu_custom_call.1} parent=1 // pred_check
      _
    $region75: #{tpu_custom_call.1} parent=1 // pred_check_branch
      %135 = sbr.rel (0) target = $region77
    $region76: #{tpu_custom_call.1} parent=1 // pred_region
      %136 = dma.done [#allocation13], 1024
    $region77: #{tpu_custom_call.1} parent=1 // pred_fallthru
      _
    // Predicated region
    $region78: #{tpu_custom_call.1} parent=1 // pred_check
      _
    $region79: #{tpu_custom_call.1} parent=1 // pred_check_branch
      %138 = sbr.rel (0) target = $region81
    $region80: #{tpu_custom_call.1} parent=1 // pred_region
      %139 = dma.done [#allocation13], 1024
    $region81: #{tpu_custom_call.1} parent=1 // pred_fallthru
      _
    %p141 = scmp.eq.s32.totalorder 0, 0
    // Predicated region
    $region82: #{tpu_custom_call.1} parent=1 // pred_check
      %p142 = pneg %p141
    $region83: #{tpu_custom_call.1} parent=1 // pred_check_branch
      %144 = sbr.rel (%p142) target = $region85
    $region84: #{tpu_custom_call.1} parent=1 // pred_region
      %145 = vst [vmem:[#allocation2] sm:$0xff] 0.0
    $region85: #{tpu_custom_call.1} parent=1 // pred_fallthru
      _
    %v146 = vld [vmem:[#allocation6] sm:$0xf]
    %v147 = vld [vmem:[#allocation6 + $0x4] sm:$0xf]
    %v148 = vld [vmem:[#allocation6 + $0x8] sm:$0xf]
    %v149 = vld [vmem:[#allocation6 + $0xc] sm:$0xf]
    %v150 = vld [vmem:[#allocation6 + $0x10] sm:$0xf]
    %v151 = vld [vmem:[#allocation6 + $0x14] sm:$0xf]
    %v152 = vld [vmem:[#allocation6 + $0x18] sm:$0xf]
    %v153 = vld [vmem:[#allocation6 + $0x1c] sm:$0xf]
    %v154 = vld [vmem:[#allocation6 + $0x20] sm:$0xf]
    %v155 = vld [vmem:[#allocation6 + $0x24] sm:$0xf]
    %v156 = vld [vmem:[#allocation6 + $0x28] sm:$0xf]
    %v157 = vld [vmem:[#allocation6 + $0x2c] sm:$0xf]
    %v158 = vld [vmem:[#allocation6 + $0x30] sm:$0xf]
    %v159 = vld [vmem:[#allocation6 + $0x34] sm:$0xf]
    %v160 = vld [vmem:[#allocation6 + $0x38] sm:$0xf]
    %v161 = vld [vmem:[#allocation6 + $0x3c] sm:$0xf]
    %v162 = vld [vmem:[#allocation8] sm:$0xf]
    %v163 = vld [vmem:[#allocation8 + $0x4] sm:$0xf]
    %v164 = vld [vmem:[#allocation8 + $0x8] sm:$0xf]
    %v165 = vld [vmem:[#allocation8 + $0xc] sm:$0xf]
    %v166 = vld [vmem:[#allocation8 + $0x10] sm:$0xf]
    %v167 = vld [vmem:[#allocation8 + $0x14] sm:$0xf]
    %v168 = vld [vmem:[#allocation8 + $0x18] sm:$0xf]
    %v169 = vld [vmem:[#allocation8 + $0x1c] sm:$0xf]
    %v170 = vld [vmem:[#allocation8 + $0x20] sm:$0xf]
    %v171 = vld [vmem:[#allocation8 + $0x24] sm:$0xf]
    %v172 = vld [vmem:[#allocation8 + $0x28] sm:$0xf]
    %v173 = vld [vmem:[#allocation8 + $0x2c] sm:$0xf]
    %v174 = vld [vmem:[#allocation8 + $0x30] sm:$0xf]
    %v175 = vld [vmem:[#allocation8 + $0x34] sm:$0xf]
    %v176 = vld [vmem:[#allocation8 + $0x38] sm:$0xf]
    %v177 = vld [vmem:[#allocation8 + $0x3c] sm:$0xf]
    %v178 = vld [vmem:[%s4] sm:$0x1]
    %v180 = vlaneseq
    %v181 = vshrl.u32 %v180, 7
    %v182 = vsub.s32 0, %v181
    %v183 = vrot.slane %v178, %v182
    %v201 = vunpack.c.l.b16 %v146
    %v202 = vunpack.c.l.b16 %v147
    %v203 = vunpack.c.l.b16 %v148
    %v204 = vunpack.c.l.b16 %v149
    %v205 = vunpack.c.l.b16 %v150
    %v206 = vunpack.c.l.b16 %v151
    %v207 = vunpack.c.l.b16 %v152
    %v208 = vunpack.c.l.b16 %v153
    %v209 = vunpack.c.l.b16 %v154
    %v210 = vunpack.c.l.b16 %v155
    %v211 = vunpack.c.l.b16 %v156
    %v212 = vunpack.c.l.b16 %v157
    %v213 = vunpack.c.l.b16 %v158
    %v214 = vunpack.c.l.b16 %v159
    %v215 = vunpack.c.l.b16 %v160
    %v216 = vunpack.c.l.b16 %v161
    %v217 = vpack.c.b16 %v202, %v201
    %v218 = vpack.c.b16 %v204, %v203
    %v219 = vpack.c.b16 %v206, %v205
    %v220 = vpack.c.b16 %v208, %v207
    %v221 = vpack.c.b16 %v210, %v209
    %v222 = vpack.c.b16 %v212, %v211
    %v223 = vpack.c.b16 %v214, %v213
    %v224 = vpack.c.b16 %v216, %v215
    %v249 = vunpack.c.l.b16 %v162
    %v250 = vunpack.c.l.b16 %v163
    %v251 = vunpack.c.l.b16 %v164
    %v252 = vunpack.c.l.b16 %v165
    %v253 = vunpack.c.l.b16 %v166
    %v254 = vunpack.c.l.b16 %v167
    %v255 = vunpack.c.l.b16 %v168
    %v256 = vunpack.c.l.b16 %v169
    %v257 = vunpack.c.l.b16 %v170
    %v258 = vunpack.c.l.b16 %v171
    %v259 = vunpack.c.l.b16 %v172
    %v260 = vunpack.c.l.b16 %v173
    %v261 = vunpack.c.l.b16 %v174
    %v262 = vunpack.c.l.b16 %v175
    %v263 = vunpack.c.l.b16 %v176
    %v264 = vunpack.c.l.b16 %v177
    %v265 = vpack.c.b16 %v250, %v249
    %v266 = vpack.c.b16 %v252, %v251
    %v267 = vpack.c.b16 %v254, %v253
    %v268 = vpack.c.b16 %v256, %v255
    %v269 = vpack.c.b16 %v258, %v257
    %v270 = vpack.c.b16 %v260, %v259
    %v271 = vpack.c.b16 %v262, %v261
    %v272 = vpack.c.b16 %v264, %v263
    %281 = vmatprep.subr.bf16.mxu0 0
    %282 = vmatpush1.bf16.msra.mxu0 %v272
    %283 = vmatprep.subr.bf16.mxu0 0
    %284 = vmatpush1.bf16.msra.mxu0 %v271
    %285 = vmatprep.subr.bf16.mxu0 0
    %286 = vmatpush1.bf16.msra.mxu0 %v270
    %287 = vmatprep.subr.bf16.mxu0 0
    %288 = vmatpush1.bf16.msra.mxu0 %v269
    %289 = vmatprep.subr.bf16.mxu0 0
    %290 = vmatpush1.bf16.msra.mxu0 %v268
    %291 = vmatprep.subr.bf16.mxu0 0
    %292 = vmatpush1.bf16.msra.mxu0 %v267
    %293 = vmatprep.subr.bf16.mxu0 0
    %294 = vmatpush1.bf16.msra.mxu0 %v266
    %295 = vmatprep.subr.bf16.mxu0 0
    %296 = vmatpush1.bf16.msra.mxu0 %v265
    %297 = vmatprep.subr.bf16.mxu0 0
    %298 = vmatpush2.bf16.msra.mxu0 0
    %299 = vmatprep.subr.bf16.mxu0 0
    %300 = vmatpush2.bf16.msra.mxu0 0
    %301 = vmatprep.subr.bf16.mxu0 0
    %302 = vmatpush2.bf16.msra.mxu0 0
    %303 = vmatprep.subr.bf16.mxu0 0
    %304 = vmatpush2.bf16.msra.mxu0 0
    %305 = vmatprep.subr.bf16.mxu0 0
    %306 = vmatpush2.bf16.msra.mxu0 0
    %307 = vmatprep.subr.bf16.mxu0 0
    %308 = vmatpush2.bf16.msra.mxu0 0
    %309 = vmatprep.subr.bf16.mxu0 0
    %310 = vmatpush2.bf16.msra.mxu0 0
    %311 = vmatprep.subr.bf16.mxu0 0
    %312 = vmatpush2.bf16.msra.mxu0 0
    %313 = vmatprep.mubr.bf16.mxu0 0
    %314 = vmatmul.mubr.bf16.gmra.mxu0 %v217
    %v315 = vpop.f32.mrf.mxu0
    %v316 = vadd.f32 %v183, %v315
    %v317 = vpop.f32.mrf.mxu0
    %v318 = vpop.f32.mrf.mxu0
    %v319 = vadd.f32 %v183, %v318
    %v320 = vpop.f32.mrf.mxu0
    %321 = vmatprep.mubr.bf16.mxu0 0
    %322 = vmatmul.mubr.bf16.gmra.mxu0 %v218
    %v323 = vpop.f32.mrf.mxu0
    %v324 = vadd.f32 %v183, %v323
    %v325 = vpop.f32.mrf.mxu0
    %v326 = vpop.f32.mrf.mxu0
    %v327 = vadd.f32 %v183, %v326
    %v328 = vpop.f32.mrf.mxu0
    %329 = vmatprep.mubr.bf16.mxu0 0
    %330 = vmatmul.mubr.bf16.gmra.mxu0 %v219
    %v331 = vpop.f32.mrf.mxu0
    %v332 = vadd.f32 %v183, %v331
    %v333 = vpop.f32.mrf.mxu0
    %v334 = vpop.f32.mrf.mxu0
    %v335 = vadd.f32 %v183, %v334
    %v336 = vpop.f32.mrf.mxu0
    %337 = vmatprep.mubr.bf16.mxu0 0
    %338 = vmatmul.mubr.bf16.gmra.mxu0 %v220
    %v339 = vpop.f32.mrf.mxu0
    %v340 = vadd.f32 %v183, %v339
    %v341 = vpop.f32.mrf.mxu0
    %v342 = vpop.f32.mrf.mxu0
    %v343 = vadd.f32 %v183, %v342
    %v344 = vpop.f32.mrf.mxu0
    %345 = vmatprep.mubr.bf16.mxu0 0
    %346 = vmatmul.mubr.bf16.gmra.mxu0 %v221
    %v347 = vpop.f32.mrf.mxu0
    %v348 = vadd.f32 %v183, %v347
    %v349 = vpop.f32.mrf.mxu0
    %v350 = vpop.f32.mrf.mxu0
    %v351 = vadd.f32 %v183, %v350
    %v352 = vpop.f32.mrf.mxu0
    %353 = vmatprep.mubr.bf16.mxu0 0
    %354 = vmatmul.mubr.bf16.gmra.mxu0 %v222
    %v355 = vpop.f32.mrf.mxu0
    %v356 = vadd.f32 %v183, %v355
    %v357 = vpop.f32.mrf.mxu0
    %v358 = vpop.f32.mrf.mxu0
    %v359 = vadd.f32 %v183, %v358
    %v360 = vpop.f32.mrf.mxu0
    %361 = vmatprep.mubr.bf16.mxu0 0
    %362 = vmatmul.mubr.bf16.gmra.mxu0 %v223
    %v363 = vpop.f32.mrf.mxu0
    %v364 = vadd.f32 %v183, %v363
    %v365 = vpop.f32.mrf.mxu0
    %v366 = vpop.f32.mrf.mxu0
    %v367 = vadd.f32 %v183, %v366
    %v368 = vpop.f32.mrf.mxu0
    %369 = vmatprep.mubr.bf16.mxu0 0
    %370 = vmatmul.mubr.bf16.gmra.mxu0 %v224
    %v371 = vpop.f32.mrf.mxu0
    %v372 = vadd.f32 %v183, %v371
    %v373 = vpop.f32.mrf.mxu0
    %v374 = vpop.f32.mrf.mxu0
    %v375 = vadd.f32 %v183, %v374
    %v376 = vpop.f32.mrf.mxu0
    %377 = vdwg.mxu0
    %v378 = vld [vmem:[#allocation3] sm:$0xf]
    %v379 = vld [vmem:[#allocation3 + $0x4] sm:$0xf]
    %v380 = vld [vmem:[#allocation3 + $0x8] sm:$0xf]
    %v381 = vld [vmem:[#allocation3 + $0xc] sm:$0xf]
    %v382 = vld [vmem:[#allocation3 + $0x10] sm:$0xf]
    %v383 = vld [vmem:[#allocation3 + $0x14] sm:$0xf]
    %v384 = vld [vmem:[#allocation3 + $0x18] sm:$0xf]
    %v385 = vld [vmem:[#allocation3 + $0x1c] sm:$0xf]
    %v386 = vld [vmem:[#allocation3 + $0x20] sm:$0xf]
    %v387 = vld [vmem:[#allocation3 + $0x24] sm:$0xf]
    %v388 = vld [vmem:[#allocation3 + $0x28] sm:$0xf]
    %v389 = vld [vmem:[#allocation3 + $0x2c] sm:$0xf]
    %v390 = vld [vmem:[#allocation3 + $0x30] sm:$0xf]
    %v391 = vld [vmem:[#allocation3 + $0x34] sm:$0xf]
    %v392 = vld [vmem:[#allocation3 + $0x38] sm:$0xf]
    %v393 = vld [vmem:[#allocation3 + $0x3c] sm:$0xf]
    %v394 = vld [vmem:[#allocation9] sm:$0xf]
    %v395 = vld [vmem:[#allocation9 + $0x4] sm:$0xf]
    %v396 = vld [vmem:[#allocation9 + $0x8] sm:$0xf]
    %v397 = vld [vmem:[#allocation9 + $0xc] sm:$0xf]
    %v398 = vld [vmem:[#allocation9 + $0x10] sm:$0xf]
    %v399 = vld [vmem:[#allocation9 + $0x14] sm:$0xf]
    %v400 = vld [vmem:[#allocation9 + $0x18] sm:$0xf]
    %v401 = vld [vmem:[#allocation9 + $0x1c] sm:$0xf]
    %v402 = vld [vmem:[#allocation9 + $0x20] sm:$0xf]
    %v403 = vld [vmem:[#allocation9 + $0x24] sm:$0xf]
    %v404 = vld [vmem:[#allocation9 + $0x28] sm:$0xf]
    %v405 = vld [vmem:[#allocation9 + $0x2c] sm:$0xf]
    %v406 = vld [vmem:[#allocation9 + $0x30] sm:$0xf]
    %v407 = vld [vmem:[#allocation9 + $0x34] sm:$0xf]
    %v408 = vld [vmem:[#allocation9 + $0x38] sm:$0xf]
    %v409 = vld [vmem:[#allocation9 + $0x3c] sm:$0xf]
    %v410 = vld [vmem:[%s6] sm:$0x1]
    %v412 = vlaneseq
    %v413 = vshrl.u32 %v412, 7
    %v414 = vsub.s32 0, %v413
    %v415 = vrot.slane %v410, %v414
    %v433 = vunpack.c.l.b16 %v378
    %v434 = vunpack.c.l.b16 %v379
    %v435 = vunpack.c.l.b16 %v380
    %v436 = vunpack.c.l.b16 %v381
    %v437 = vunpack.c.l.b16 %v382
    %v438 = vunpack.c.l.b16 %v383
    %v439 = vunpack.c.l.b16 %v384
    %v440 = vunpack.c.l.b16 %v385
    %v441 = vunpack.c.l.b16 %v386
    %v442 = vunpack.c.l.b16 %v387
    %v443 = vunpack.c.l.b16 %v388
    %v444 = vunpack.c.l.b16 %v389
    %v445 = vunpack.c.l.b16 %v390
    %v446 = vunpack.c.l.b16 %v391
    %v447 = vunpack.c.l.b16 %v392
    %v448 = vunpack.c.l.b16 %v393
    %v449 = vpack.c.b16 %v434, %v433
    %v450 = vpack.c.b16 %v436, %v435
    %v451 = vpack.c.b16 %v438, %v437
    %v452 = vpack.c.b16 %v440, %v439
    %v453 = vpack.c.b16 %v442, %v441
    %v454 = vpack.c.b16 %v444, %v443
    %v455 = vpack.c.b16 %v446, %v445
    %v456 = vpack.c.b16 %v448, %v447
    %v481 = vunpack.c.l.b16 %v394
    %v482 = vunpack.c.l.b16 %v395
    %v483 = vunpack.c.l.b16 %v396
    %v484 = vunpack.c.l.b16 %v397
    %v485 = vunpack.c.l.b16 %v398
    %v486 = vunpack.c.l.b16 %v399
    %v487 = vunpack.c.l.b16 %v400
    %v488 = vunpack.c.l.b16 %v401
    %v489 = vunpack.c.l.b16 %v402
    %v490 = vunpack.c.l.b16 %v403
    %v491 = vunpack.c.l.b16 %v404
    %v492 = vunpack.c.l.b16 %v405
    %v493 = vunpack.c.l.b16 %v406
    %v494 = vunpack.c.l.b16 %v407
    %v495 = vunpack.c.l.b16 %v408
    %v496 = vunpack.c.l.b16 %v409
    %v497 = vpack.c.b16 %v482, %v481
    %v498 = vpack.c.b16 %v484, %v483
    %v499 = vpack.c.b16 %v486, %v485
    %v500 = vpack.c.b16 %v488, %v487
    %v501 = vpack.c.b16 %v490, %v489
    %v502 = vpack.c.b16 %v492, %v491
    %v503 = vpack.c.b16 %v494, %v493
    %v504 = vpack.c.b16 %v496, %v495
    %513 = vmatprep.subr.bf16.mxu0 0
    %514 = vmatpush1.bf16.msra.mxu0 %v504
    %515 = vmatprep.subr.bf16.mxu0 0
    %516 = vmatpush1.bf16.msra.mxu0 %v503
    %517 = vmatprep.subr.bf16.mxu0 0
    %518 = vmatpush1.bf16.msra.mxu0 %v502
    %519 = vmatprep.subr.bf16.mxu0 0
    %520 = vmatpush1.bf16.msra.mxu0 %v501
    %521 = vmatprep.subr.bf16.mxu0 0
    %522 = vmatpush1.bf16.msra.mxu0 %v500
    %523 = vmatprep.subr.bf16.mxu0 0
    %524 = vmatpush1.bf16.msra.mxu0 %v499
    %525 = vmatprep.subr.bf16.mxu0 0
    %526 = vmatpush1.bf16.msra.mxu0 %v498
    %527 = vmatprep.subr.bf16.mxu0 0
    %528 = vmatpush1.bf16.msra.mxu0 %v497
    %529 = vmatprep.subr.bf16.mxu0 0
    %530 = vmatpush2.bf16.msra.mxu0 0
    %531 = vmatprep.subr.bf16.mxu0 0
    %532 = vmatpush2.bf16.msra.mxu0 0
    %533 = vmatprep.subr.bf16.mxu0 0
    %534 = vmatpush2.bf16.msra.mxu0 0
    %535 = vmatprep.subr.bf16.mxu0 0
    %536 = vmatpush2.bf16.msra.mxu0 0
    %537 = vmatprep.subr.bf16.mxu0 0
    %538 = vmatpush2.bf16.msra.mxu0 0
    %539 = vmatprep.subr.bf16.mxu0 0
    %540 = vmatpush2.bf16.msra.mxu0 0
    %541 = vmatprep.subr.bf16.mxu0 0
    %542 = vmatpush2.bf16.msra.mxu0 0
    %543 = vmatprep.subr.bf16.mxu0 0
    %544 = vmatpush2.bf16.msra.mxu0 0
    %545 = vmatprep.mubr.bf16.mxu0 0
    %546 = vmatmul.mubr.bf16.gmra.mxu0 %v449
    %v547 = vpop.f32.mrf.mxu0
    %v548 = vadd.f32 %v415, %v547
    %v549 = vpop.f32.mrf.mxu0
    %v550 = vpop.f32.mrf.mxu0
    %v551 = vadd.f32 %v415, %v550
    %v552 = vpop.f32.mrf.mxu0
    %553 = vmatprep.mubr.bf16.mxu0 0
    %554 = vmatmul.mubr.bf16.gmra.mxu0 %v450
    %v555 = vpop.f32.mrf.mxu0
    %v556 = vadd.f32 %v415, %v555
    %v557 = vpop.f32.mrf.mxu0
    %v558 = vpop.f32.mrf.mxu0
    %v559 = vadd.f32 %v415, %v558
    %v560 = vpop.f32.mrf.mxu0
    %561 = vmatprep.mubr.bf16.mxu0 0
    %562 = vmatmul.mubr.bf16.gmra.mxu0 %v451
    %v563 = vpop.f32.mrf.mxu0
    %v564 = vadd.f32 %v415, %v563
    %v565 = vpop.f32.mrf.mxu0
    %v566 = vpop.f32.mrf.mxu0
    %v567 = vadd.f32 %v415, %v566
    %v568 = vpop.f32.mrf.mxu0
    %569 = vmatprep.mubr.bf16.mxu0 0
    %570 = vmatmul.mubr.bf16.gmra.mxu0 %v452
    %v571 = vpop.f32.mrf.mxu0
    %v572 = vadd.f32 %v415, %v571
    %v573 = vpop.f32.mrf.mxu0
    %v574 = vpop.f32.mrf.mxu0
    %v575 = vadd.f32 %v415, %v574
    %v576 = vpop.f32.mrf.mxu0
    %577 = vmatprep.mubr.bf16.mxu0 0
    %578 = vmatmul.mubr.bf16.gmra.mxu0 %v453
    %v579 = vpop.f32.mrf.mxu0
    %v580 = vadd.f32 %v415, %v579
    %v581 = vpop.f32.mrf.mxu0
    %v582 = vpop.f32.mrf.mxu0
    %v583 = vadd.f32 %v415, %v582
    %v584 = vpop.f32.mrf.mxu0
    %585 = vmatprep.mubr.bf16.mxu0 0
    %586 = vmatmul.mubr.bf16.gmra.mxu0 %v454
    %v587 = vpop.f32.mrf.mxu0
    %v588 = vadd.f32 %v415, %v587
    %v589 = vpop.f32.mrf.mxu0
    %v590 = vpop.f32.mrf.mxu0
    %v591 = vadd.f32 %v415, %v590
    %v592 = vpop.f32.mrf.mxu0
    %593 = vmatprep.mubr.bf16.mxu0 0
    %594 = vmatmul.mubr.bf16.gmra.mxu0 %v455
    %v595 = vpop.f32.mrf.mxu0
    %v596 = vadd.f32 %v415, %v595
    %v597 = vpop.f32.mrf.mxu0
    %v598 = vpop.f32.mrf.mxu0
    %v599 = vadd.f32 %v415, %v598
    %v600 = vpop.f32.mrf.mxu0
    %601 = vmatprep.mubr.bf16.mxu0 0
    %602 = vmatmul.mubr.bf16.gmra.mxu0 %v456
    %v603 = vpop.f32.mrf.mxu0
    %v604 = vadd.f32 %v415, %v603
    %v605 = vpop.f32.mrf.mxu0
    %v606 = vpop.f32.mrf.mxu0
    %v607 = vadd.f32 %v415, %v606
    %v608 = vpop.f32.mrf.mxu0
    %609 = vdwg.mxu0
    %v610 = vmax.f32 %v548, 0.0
    %v611 = vmax.f32 %v551, 0.0
    %v612 = vmax.f32 %v556, 0.0
    %v613 = vmax.f32 %v559, 0.0
    %v614 = vmax.f32 %v564, 0.0
    %v615 = vmax.f32 %v567, 0.0
    %v616 = vmax.f32 %v572, 0.0
    %v617 = vmax.f32 %v575, 0.0
    %v618 = vmax.f32 %v580, 0.0
    %v619 = vmax.f32 %v583, 0.0
    %v620 = vmax.f32 %v588, 0.0
    %v621 = vmax.f32 %v591, 0.0
    %v622 = vmax.f32 %v596, 0.0
    %v623 = vmax.f32 %v599, 0.0
    %v624 = vmax.f32 %v604, 0.0
    %v625 = vmax.f32 %v607, 0.0
    %v626 = vand.u32 2147483647, %v548
    %v627 = vand.u32 2147483647, %v551
    %v628 = vand.u32 2147483647, %v556
    %v629 = vand.u32 2147483647, %v559
    %v630 = vand.u32 2147483647, %v564
    %v631 = vand.u32 2147483647, %v567
    %v632 = vand.u32 2147483647, %v572
    %v633 = vand.u32 2147483647, %v575
    %v634 = vand.u32 2147483647, %v580
    %v635 = vand.u32 2147483647, %v583
    %v636 = vand.u32 2147483647, %v588
    %v637 = vand.u32 2147483647, %v591
    %v638 = vand.u32 2147483647, %v596
    %v639 = vand.u32 2147483647, %v599
    %v640 = vand.u32 2147483647, %v604
    %v641 = vand.u32 2147483647, %v607
    %v642 = vsub.f32 0.0, %v626
    %v643 = vsub.f32 0.0, %v627
    %v644 = vsub.f32 0.0, %v628
    %v645 = vsub.f32 0.0, %v629
    %v646 = vsub.f32 0.0, %v630
    %v647 = vsub.f32 0.0, %v631
    %v648 = vsub.f32 0.0, %v632
    %v649 = vsub.f32 0.0, %v633
    %v650 = vsub.f32 0.0, %v634
    %v651 = vsub.f32 0.0, %v635
    %v652 = vsub.f32 0.0, %v636
    %v653 = vsub.f32 0.0, %v637
    %v654 = vsub.f32 0.0, %v638
    %v655 = vsub.f32 0.0, %v639
    %v656 = vsub.f32 0.0, %v640
    %v657 = vsub.f32 0.0, %v641
    %v658 = vmul.f32 %v642, 1.442695
    %v659 = vpow.pop %v658
    %v660 = vmul.f32 %v643, 1.442695
    %v661 = vpow.pop %v660
    %v662 = vmul.f32 %v644, 1.442695
    %v663 = vpow.pop %v662
    %v664 = vmul.f32 %v645, 1.442695
    %v665 = vpow.pop %v664
    %v666 = vmul.f32 %v646, 1.442695
    %v667 = vpow.pop %v666
    %v668 = vmul.f32 %v647, 1.442695
    %v669 = vpow.pop %v668
    %v670 = vmul.f32 %v648, 1.442695
    %v671 = vpow.pop %v670
    %v672 = vmul.f32 %v649, 1.442695
    %v673 = vpow.pop %v672
    %v674 = vmul.f32 %v650, 1.442695
    %v675 = vpow.pop %v674
    %v676 = vmul.f32 %v651, 1.442695
    %v677 = vpow.pop %v676
    %v678 = vmul.f32 %v652, 1.442695
    %v679 = vpow.pop %v678
    %v680 = vmul.f32 %v653, 1.442695
    %v681 = vpow.pop %v680
    %v682 = vmul.f32 %v654, 1.442695
    %v683 = vpow.pop %v682
    %v684 = vmul.f32 %v655, 1.442695
    %v685 = vpow.pop %v684
    %v686 = vmul.f32 %v656, 1.442695
    %v687 = vpow.pop %v686
    %v688 = vmul.f32 %v657, 1.442695
    %v689 = vpow.pop %v688
    %v690 = vadd.f32 %v659, 1.0
    %v691 = vadd.f32 %v661, 1.0
    %v692 = vadd.f32 %v663, 1.0
    %v693 = vadd.f32 %v665, 1.0
    %v694 = vadd.f32 %v667, 1.0
    %v695 = vadd.f32 %v669, 1.0
    %v696 = vadd.f32 %v671, 1.0
    %v697 = vadd.f32 %v673, 1.0
    %v698 = vadd.f32 %v675, 1.0
    %v699 = vadd.f32 %v677, 1.0
    %v700 = vadd.f32 %v679, 1.0
    %v701 = vadd.f32 %v681, 1.0
    %v702 = vadd.f32 %v683, 1.0
    %v703 = vadd.f32 %v685, 1.0
    %v704 = vadd.f32 %v687, 1.0
    %v705 = vadd.f32 %v689, 1.0
    %v706 = vlog2.pop %v690
    %v707 = vmul.f32 %v706, 0.6931472
    %v708 = vlog2.pop %v691
    %v709 = vmul.f32 %v708, 0.6931472
    %v710 = vlog2.pop %v692
    %v711 = vmul.f32 %v710, 0.6931472
    %v712 = vlog2.pop %v693
    %v713 = vmul.f32 %v712, 0.6931472
    %v714 = vlog2.pop %v694
    %v715 = vmul.f32 %v714, 0.6931472
    %v716 = vlog2.pop %v695
    %v717 = vmul.f32 %v716, 0.6931472
    %v718 = vlog2.pop %v696
    %v719 = vmul.f32 %v718, 0.6931472
    %v720 = vlog2.pop %v697
    %v721 = vmul.f32 %v720, 0.6931472
    %v722 = vlog2.pop %v698
    %v723 = vmul.f32 %v722, 0.6931472
    %v724 = vlog2.pop %v699
    %v725 = vmul.f32 %v724, 0.6931472
    %v726 = vlog2.pop %v700
    %v727 = vmul.f32 %v726, 0.6931472
    %v728 = vlog2.pop %v701
    %v729 = vmul.f32 %v728, 0.6931472
    %v730 = vlog2.pop %v702
    %v731 = vmul.f32 %v730, 0.6931472
    %v732 = vlog2.pop %v703
    %v733 = vmul.f32 %v732, 0.6931472
    %v734 = vlog2.pop %v704
    %v735 = vmul.f32 %v734, 0.6931472
    %v736 = vlog2.pop %v705
    %v737 = vmul.f32 %v736, 0.6931472
    %v738 = vadd.f32 %v610, %v707
    %v739 = vadd.f32 %v611, %v709
    %v740 = vadd.f32 %v612, %v711
    %v741 = vadd.f32 %v613, %v713
    %v742 = vadd.f32 %v614, %v715
    %v743 = vadd.f32 %v615, %v717
    %v744 = vadd.f32 %v616, %v719
    %v745 = vadd.f32 %v617, %v721
    %v746 = vadd.f32 %v618, %v723
    %v747 = vadd.f32 %v619, %v725
    %v748 = vadd.f32 %v620, %v727
    %v749 = vadd.f32 %v621, %v729
    %v750 = vadd.f32 %v622, %v731
    %v751 = vadd.f32 %v623, %v733
    %v752 = vadd.f32 %v624, %v735
    %v753 = vadd.f32 %v625, %v737
    %v754 = vsub.f32 %v738, 0.6931472
    %v755 = vsub.f32 %v739, 0.6931472
    %v756 = vsub.f32 %v740, 0.6931472
    %v757 = vsub.f32 %v741, 0.6931472
    %v758 = vsub.f32 %v742, 0.6931472
    %v759 = vsub.f32 %v743, 0.6931472
    %v760 = vsub.f32 %v744, 0.6931472
    %v761 = vsub.f32 %v745, 0.6931472
    %v762 = vsub.f32 %v746, 0.6931472
    %v763 = vsub.f32 %v747, 0.6931472
    %v764 = vsub.f32 %v748, 0.6931472
    %v765 = vsub.f32 %v749, 0.6931472
    %v766 = vsub.f32 %v750, 0.6931472
    %v767 = vsub.f32 %v751, 0.6931472
    %v768 = vsub.f32 %v752, 0.6931472
    %v769 = vsub.f32 %v753, 0.6931472
    %v770 = vpack.c.bf16 %v755, %v754
    %v771 = vpack.c.bf16 %v757, %v756
    %v772 = vpack.c.bf16 %v759, %v758
    %v773 = vpack.c.bf16 %v761, %v760
    %v774 = vpack.c.bf16 %v763, %v762
    %v775 = vpack.c.bf16 %v765, %v764
    %v776 = vpack.c.bf16 %v767, %v766
    %v777 = vpack.c.bf16 %v769, %v768
    %v778 = vld [vmem:[#allocation11] sm:$0xf]
    %v779 = vld [vmem:[#allocation11 + $0x4] sm:$0xf]
    %v780 = vld [vmem:[#allocation11 + $0x8] sm:$0xf]
    %v781 = vld [vmem:[#allocation11 + $0xc] sm:$0xf]
    %v782 = vld [vmem:[#allocation11 + $0x10] sm:$0xf]
    %v783 = vld [vmem:[#allocation11 + $0x14] sm:$0xf]
    %v784 = vld [vmem:[#allocation11 + $0x18] sm:$0xf]
    %v785 = vld [vmem:[#allocation11 + $0x1c] sm:$0xf]
    %v786 = vld [vmem:[#allocation11 + $0x20] sm:$0xf]
    %v787 = vld [vmem:[#allocation11 + $0x24] sm:$0xf]
    %v788 = vld [vmem:[#allocation11 + $0x28] sm:$0xf]
    %v789 = vld [vmem:[#allocation11 + $0x2c] sm:$0xf]
    %v790 = vld [vmem:[#allocation11 + $0x30] sm:$0xf]
    %v791 = vld [vmem:[#allocation11 + $0x34] sm:$0xf]
    %v792 = vld [vmem:[#allocation11 + $0x38] sm:$0xf]
    %v793 = vld [vmem:[#allocation11 + $0x3c] sm:$0xf]
    %v794 = vld [vmem:[%s8] sm:$0x1]
    %v796 = vlaneseq
    %v797 = vshrl.u32 %v796, 7
    %v798 = vsub.s32 0, %v797
    %v799 = vrot.slane %v794, %v798
    %v817 = vunpack.c.l.b16 %v778
    %v818 = vunpack.c.l.b16 %v779
    %v819 = vunpack.c.l.b16 %v780
    %v820 = vunpack.c.l.b16 %v781
    %v821 = vunpack.c.l.b16 %v782
    %v822 = vunpack.c.l.b16 %v783
    %v823 = vunpack.c.l.b16 %v784
    %v824 = vunpack.c.l.b16 %v785
    %v825 = vunpack.c.l.b16 %v786
    %v826 = vunpack.c.l.b16 %v787
    %v827 = vunpack.c.l.b16 %v788
    %v828 = vunpack.c.l.b16 %v789
    %v829 = vunpack.c.l.b16 %v790
    %v830 = vunpack.c.l.b16 %v791
    %v831 = vunpack.c.l.b16 %v792
    %v832 = vunpack.c.l.b16 %v793
    %v833 = vpack.c.b16 %v818, %v817
    %v834 = vpack.c.b16 %v820, %v819
    %v835 = vpack.c.b16 %v822, %v821
    %v836 = vpack.c.b16 %v824, %v823
    %v837 = vpack.c.b16 %v826, %v825
    %v838 = vpack.c.b16 %v828, %v827
    %v839 = vpack.c.b16 %v830, %v829
    %v840 = vpack.c.b16 %v832, %v831
    %849 = vmatprep.subr.bf16.mxu0 0
    %850 = vmatpush1.bf16.msra.mxu0 %v840
    %851 = vmatprep.subr.bf16.mxu0 0
    %852 = vmatpush1.bf16.msra.mxu0 %v839
    %853 = vmatprep.subr.bf16.mxu0 0
    %854 = vmatpush1.bf16.msra.mxu0 %v838
    %855 = vmatprep.subr.bf16.mxu0 0
    %856 = vmatpush1.bf16.msra.mxu0 %v837
    %857 = vmatprep.subr.bf16.mxu0 0
    %858 = vmatpush1.bf16.msra.mxu0 %v836
    %859 = vmatprep.subr.bf16.mxu0 0
    %860 = vmatpush1.bf16.msra.mxu0 %v835
    %861 = vmatprep.subr.bf16.mxu0 0
    %862 = vmatpush1.bf16.msra.mxu0 %v834
    %863 = vmatprep.subr.bf16.mxu0 0
    %864 = vmatpush1.bf16.msra.mxu0 %v833
    %865 = vmatprep.subr.bf16.mxu0 0
    %866 = vmatpush2.bf16.msra.mxu0 0
    %867 = vmatprep.subr.bf16.mxu0 0
    %868 = vmatpush2.bf16.msra.mxu0 0
    %869 = vmatprep.subr.bf16.mxu0 0
    %870 = vmatpush2.bf16.msra.mxu0 0
    %871 = vmatprep.subr.bf16.mxu0 0
    %872 = vmatpush2.bf16.msra.mxu0 0
    %873 = vmatprep.subr.bf16.mxu0 0
    %874 = vmatpush2.bf16.msra.mxu0 0
    %875 = vmatprep.subr.bf16.mxu0 0
    %876 = vmatpush2.bf16.msra.mxu0 0
    %877 = vmatprep.subr.bf16.mxu0 0
    %878 = vmatpush2.bf16.msra.mxu0 0
    %879 = vmatprep.subr.bf16.mxu0 0
    %880 = vmatpush2.bf16.msra.mxu0 0
    %881 = vmatprep.mubr.bf16.mxu0 0
    %882 = vmatmul.mubr.bf16.gmra.mxu0 %v770
    %v883 = vpop.f32.mrf.mxu0
    %v884 = vadd.f32 %v799, %v883
    %v885 = vpop.f32.mrf.mxu0
    %v886 = vpop.f32.mrf.mxu0
    %v887 = vadd.f32 %v799, %v886
    %v888 = vpop.f32.mrf.mxu0
    %889 = vmatprep.mubr.bf16.mxu0 0
    %890 = vmatmul.mubr.bf16.gmra.mxu0 %v771
    %v891 = vpop.f32.mrf.mxu0
    %v892 = vadd.f32 %v799, %v891
    %v893 = vpop.f32.mrf.mxu0
    %v894 = vpop.f32.mrf.mxu0
    %v895 = vadd.f32 %v799, %v894
    %v896 = vpop.f32.mrf.mxu0
    %897 = vmatprep.mubr.bf16.mxu0 0
    %898 = vmatmul.mubr.bf16.gmra.mxu0 %v772
    %v899 = vpop.f32.mrf.mxu0
    %v900 = vadd.f32 %v799, %v899
    %v901 = vpop.f32.mrf.mxu0
    %v902 = vpop.f32.mrf.mxu0
    %v903 = vadd.f32 %v799, %v902
    %v904 = vpop.f32.mrf.mxu0
    %905 = vmatprep.mubr.bf16.mxu0 0
    %906 = vmatmul.mubr.bf16.gmra.mxu0 %v773
    %v907 = vpop.f32.mrf.mxu0
    %v908 = vadd.f32 %v799, %v907
    %v909 = vpop.f32.mrf.mxu0
    %v910 = vpop.f32.mrf.mxu0
    %v911 = vadd.f32 %v799, %v910
    %v912 = vpop.f32.mrf.mxu0
    %913 = vmatprep.mubr.bf16.mxu0 0
    %914 = vmatmul.mubr.bf16.gmra.mxu0 %v774
    %v915 = vpop.f32.mrf.mxu0
    %v916 = vadd.f32 %v799, %v915
    %v917 = vpop.f32.mrf.mxu0
    %v918 = vpop.f32.mrf.mxu0
    %v919 = vadd.f32 %v799, %v918
    %v920 = vpop.f32.mrf.mxu0
    %921 = vmatprep.mubr.bf16.mxu0 0
    %922 = vmatmul.mubr.bf16.gmra.mxu0 %v775
    %v923 = vpop.f32.mrf.mxu0
    %v924 = vadd.f32 %v799, %v923
    %v925 = vpop.f32.mrf.mxu0
    %v926 = vpop.f32.mrf.mxu0
    %v927 = vadd.f32 %v799, %v926
    %v928 = vpop.f32.mrf.mxu0
    %929 = vmatprep.mubr.bf16.mxu0 0
    %930 = vmatmul.mubr.bf16.gmra.mxu0 %v776
    %v931 = vpop.f32.mrf.mxu0
    %v932 = vadd.f32 %v799, %v931
    %v933 = vpop.f32.mrf.mxu0
    %v934 = vpop.f32.mrf.mxu0
    %v935 = vadd.f32 %v799, %v934
    %v936 = vpop.f32.mrf.mxu0
    %937 = vmatprep.mubr.bf16.mxu0 0
    %938 = vmatmul.mubr.bf16.gmra.mxu0 %v777
    %v939 = vpop.f32.mrf.mxu0
    %v940 = vadd.f32 %v799, %v939
    %v941 = vpop.f32.mrf.mxu0
    %v942 = vpop.f32.mrf.mxu0
    %v943 = vadd.f32 %v799, %v942
    %v944 = vpop.f32.mrf.mxu0
    %945 = vdwg.mxu0
    %v946 = vmax.f32 %v884, 0.0
    %v947 = vmax.f32 %v887, 0.0
    %v948 = vmax.f32 %v892, 0.0
    %v949 = vmax.f32 %v895, 0.0
    %v950 = vmax.f32 %v900, 0.0
    %v951 = vmax.f32 %v903, 0.0
    %v952 = vmax.f32 %v908, 0.0
    %v953 = vmax.f32 %v911, 0.0
    %v954 = vmax.f32 %v916, 0.0
    %v955 = vmax.f32 %v919, 0.0
    %v956 = vmax.f32 %v924, 0.0
    %v957 = vmax.f32 %v927, 0.0
    %v958 = vmax.f32 %v932, 0.0
    %v959 = vmax.f32 %v935, 0.0
    %v960 = vmax.f32 %v940, 0.0
    %v961 = vmax.f32 %v943, 0.0
    %v962 = vand.u32 2147483647, %v884
    %v963 = vand.u32 2147483647, %v887
    %v964 = vand.u32 2147483647, %v892
    %v965 = vand.u32 2147483647, %v895
    %v966 = vand.u32 2147483647, %v900
    %v967 = vand.u32 2147483647, %v903
    %v968 = vand.u32 2147483647, %v908
    %v969 = vand.u32 2147483647, %v911
    %v970 = vand.u32 2147483647, %v916
    %v971 = vand.u32 2147483647, %v919
    %v972 = vand.u32 2147483647, %v924
    %v973 = vand.u32 2147483647, %v927
    %v974 = vand.u32 2147483647, %v932
    %v975 = vand.u32 2147483647, %v935
    %v976 = vand.u32 2147483647, %v940
    %v977 = vand.u32 2147483647, %v943
    %v978 = vsub.f32 0.0, %v962
    %v979 = vsub.f32 0.0, %v963
    %v980 = vsub.f32 0.0, %v964
    %v981 = vsub.f32 0.0, %v965
    %v982 = vsub.f32 0.0, %v966
    %v983 = vsub.f32 0.0, %v967
    %v984 = vsub.f32 0.0, %v968
    %v985 = vsub.f32 0.0, %v969
    %v986 = vsub.f32 0.0, %v970
    %v987 = vsub.f32 0.0, %v971
    %v988 = vsub.f32 0.0, %v972
    %v989 = vsub.f32 0.0, %v973
    %v990 = vsub.f32 0.0, %v974
    %v991 = vsub.f32 0.0, %v975
    %v992 = vsub.f32 0.0, %v976
    %v993 = vsub.f32 0.0, %v977
    %v994 = vmul.f32 %v978, 1.442695
    %v995 = vpow.pop %v994
    %v996 = vmul.f32 %v979, 1.442695
    %v997 = vpow.pop %v996
    %v998 = vmul.f32 %v980, 1.442695
    %v999 = vpow.pop %v998
    %v1000 = vmul.f32 %v981, 1.442695
    %v1001 = vpow.pop %v1000
    %v1002 = vmul.f32 %v982, 1.442695
    %v1003 = vpow.pop %v1002
    %v1004 = vmul.f32 %v983, 1.442695
    %v1005 = vpow.pop %v1004
    %v1006 = vmul.f32 %v984, 1.442695
    %v1007 = vpow.pop %v1006
    %v1008 = vmul.f32 %v985, 1.442695
    %v1009 = vpow.pop %v1008
    %v1010 = vmul.f32 %v986, 1.442695
    %v1011 = vpow.pop %v1010
    %v1012 = vmul.f32 %v987, 1.442695
    %v1013 = vpow.pop %v1012
    %v1014 = vmul.f32 %v988, 1.442695
    %v1015 = vpow.pop %v1014
    %v1016 = vmul.f32 %v989, 1.442695
    %v1017 = vpow.pop %v1016
    %v1018 = vmul.f32 %v990, 1.442695
    %v1019 = vpow.pop %v1018
    %v1020 = vmul.f32 %v991, 1.442695
    %v1021 = vpow.pop %v1020
    %v1022 = vmul.f32 %v992, 1.442695
    %v1023 = vpow.pop %v1022
    %v1024 = vmul.f32 %v993, 1.442695
    %v1025 = vpow.pop %v1024
    %v1026 = vadd.f32 %v995, 1.0
    %v1027 = vadd.f32 %v997, 1.0
    %v1028 = vadd.f32 %v999, 1.0
    %v1029 = vadd.f32 %v1001, 1.0
    %v1030 = vadd.f32 %v1003, 1.0
    %v1031 = vadd.f32 %v1005, 1.0
    %v1032 = vadd.f32 %v1007, 1.0
    %v1033 = vadd.f32 %v1009, 1.0
    %v1034 = vadd.f32 %v1011, 1.0
    %v1035 = vadd.f32 %v1013, 1.0
    %v1036 = vadd.f32 %v1015, 1.0
    %v1037 = vadd.f32 %v1017, 1.0
    %v1038 = vadd.f32 %v1019, 1.0
    %v1039 = vadd.f32 %v1021, 1.0
    %v1040 = vadd.f32 %v1023, 1.0
    %v1041 = vadd.f32 %v1025, 1.0
    %v1042 = vlog2.pop %v1026
    %v1043 = vmul.f32 %v1042, 0.6931472
    %v1044 = vlog2.pop %v1027
    %v1045 = vmul.f32 %v1044, 0.6931472
    %v1046 = vlog2.pop %v1028
    %v1047 = vmul.f32 %v1046, 0.6931472
    %v1048 = vlog2.pop %v1029
    %v1049 = vmul.f32 %v1048, 0.6931472
    %v1050 = vlog2.pop %v1030
    %v1051 = vmul.f32 %v1050, 0.6931472
    %v1052 = vlog2.pop %v1031
    %v1053 = vmul.f32 %v1052, 0.6931472
    %v1054 = vlog2.pop %v1032
    %v1055 = vmul.f32 %v1054, 0.6931472
    %v1056 = vlog2.pop %v1033
    %v1057 = vmul.f32 %v1056, 0.6931472
    %v1058 = vlog2.pop %v1034
    %v1059 = vmul.f32 %v1058, 0.6931472
    %v1060 = vlog2.pop %v1035
    %v1061 = vmul.f32 %v1060, 0.6931472
    %v1062 = vlog2.pop %v1036
    %v1063 = vmul.f32 %v1062, 0.6931472
    %v1064 = vlog2.pop %v1037
    %v1065 = vmul.f32 %v1064, 0.6931472
    %v1066 = vlog2.pop %v1038
    %v1067 = vmul.f32 %v1066, 0.6931472
    %v1068 = vlog2.pop %v1039
    %v1069 = vmul.f32 %v1068, 0.6931472
    %v1070 = vlog2.pop %v1040
    %v1071 = vmul.f32 %v1070, 0.6931472
    %v1072 = vlog2.pop %v1041
    %v1073 = vmul.f32 %v1072, 0.6931472
    %v1074 = vadd.f32 %v946, %v1043
    %v1075 = vadd.f32 %v947, %v1045
    %v1076 = vadd.f32 %v948, %v1047
    %v1077 = vadd.f32 %v949, %v1049
    %v1078 = vadd.f32 %v950, %v1051
    %v1079 = vadd.f32 %v951, %v1053
    %v1080 = vadd.f32 %v952, %v1055
    %v1081 = vadd.f32 %v953, %v1057
    %v1082 = vadd.f32 %v954, %v1059
    %v1083 = vadd.f32 %v955, %v1061
    %v1084 = vadd.f32 %v956, %v1063
    %v1085 = vadd.f32 %v957, %v1065
    %v1086 = vadd.f32 %v958, %v1067
    %v1087 = vadd.f32 %v959, %v1069
    %v1088 = vadd.f32 %v960, %v1071
    %v1089 = vadd.f32 %v961, %v1073
    %v1090 = vsub.f32 %v1074, 0.6931472
    %v1091 = vsub.f32 %v1075, 0.6931472
    %v1092 = vsub.f32 %v1076, 0.6931472
    %v1093 = vsub.f32 %v1077, 0.6931472
    %v1094 = vsub.f32 %v1078, 0.6931472
    %v1095 = vsub.f32 %v1079, 0.6931472
    %v1096 = vsub.f32 %v1080, 0.6931472
    %v1097 = vsub.f32 %v1081, 0.6931472
    %v1098 = vsub.f32 %v1082, 0.6931472
    %v1099 = vsub.f32 %v1083, 0.6931472
    %v1100 = vsub.f32 %v1084, 0.6931472
    %v1101 = vsub.f32 %v1085, 0.6931472
    %v1102 = vsub.f32 %v1086, 0.6931472
    %v1103 = vsub.f32 %v1087, 0.6931472
    %v1104 = vsub.f32 %v1088, 0.6931472
    %v1105 = vsub.f32 %v1089, 0.6931472
    %v1106 = vmul.f32 %v316, %v1090
    %v1107 = vmul.f32 %v319, %v1091
    %v1108 = vmul.f32 %v324, %v1092
    %v1109 = vmul.f32 %v327, %v1093
    %v1110 = vmul.f32 %v332, %v1094
    %v1111 = vmul.f32 %v335, %v1095
    %v1112 = vmul.f32 %v340, %v1096
    %v1113 = vmul.f32 %v343, %v1097
    %v1114 = vmul.f32 %v348, %v1098
    %v1115 = vmul.f32 %v351, %v1099
    %v1116 = vmul.f32 %v356, %v1100
    %v1117 = vmul.f32 %v359, %v1101
    %v1118 = vmul.f32 %v364, %v1102
    %v1119 = vmul.f32 %v367, %v1103
    %v1120 = vmul.f32 %v372, %v1104
    %v1121 = vmul.f32 %v375, %v1105
    %v1122 = vld [vmem:[%s2] sm:$0x1]
    %v1123 = vlaneseq
    %v1124 = vshrl.u32 %v1123, 7
    %v1125 = vlaneseq
    %v1126 = vshrl.u32 %v1125, 7
    %v1127 = vsub.s32 0, %v1126
    %v1128 = vrot.slane %v1122, %v1127
    %vm1129 = vcmp.eq.s32.totalorder %v1124, %v1128
    %v1130 = vsel %vm1129, 1, 0
    %v1131 = vcvt.s32.f32 %v1130
    %v1132 = vpack.c.bf16 %v1131, %v1131
    %v1133 = vld [vmem:[#allocation2] sm:$0xff]
    %v1134 = vpack.c.bf16 %v1107, %v1106
    %v1135 = vpack.c.bf16 %v1109, %v1108
    %v1136 = vpack.c.bf16 %v1111, %v1110
    %v1137 = vpack.c.bf16 %v1113, %v1112
    %v1138 = vpack.c.bf16 %v1115, %v1114
    %v1139 = vpack.c.bf16 %v1117, %v1116
    %v1140 = vpack.c.bf16 %v1119, %v1118
    %v1141 = vpack.c.bf16 %v1121, %v1120
    %1142 = vmatprep.subr.bf16.mxu0 0
    %1143 = vmatpush1.bf16.msra.mxu0 %v1141
    %1144 = vmatprep.subr.bf16.mxu0 0
    %1145 = vmatpush1.bf16.msra.mxu0 %v1140
    %1146 = vmatprep.subr.bf16.mxu0 0
    %1147 = vmatpush1.bf16.msra.mxu0 %v1139
    %1148 = vmatprep.subr.bf16.mxu0 0
    %1149 = vmatpush1.bf16.msra.mxu0 %v1138
    %1150 = vmatprep.subr.bf16.mxu0 0
    %1151 = vmatpush1.bf16.msra.mxu0 %v1137
    %1152 = vmatprep.subr.bf16.mxu0 0
    %1153 = vmatpush1.bf16.msra.mxu0 %v1136
    %1154 = vmatprep.subr.bf16.mxu0 0
    %1155 = vmatpush1.bf16.msra.mxu0 %v1135
    %1156 = vmatprep.subr.bf16.mxu0 0
    %1157 = vmatpush1.bf16.msra.mxu0 %v1134
    %1158 = vmatprep.subr.bf16.mxu0 0
    %1159 = vmatpush2.bf16.msra.mxu0 0
    %1160 = vmatprep.subr.bf16.mxu0 0
    %1161 = vmatpush2.bf16.msra.mxu0 0
    %1162 = vmatprep.subr.bf16.mxu0 0
    %1163 = vmatpush2.bf16.msra.mxu0 0
    %1164 = vmatprep.subr.bf16.mxu0 0
    %1165 = vmatpush2.bf16.msra.mxu0 0
    %1166 = vmatprep.subr.bf16.mxu0 0
    %1167 = vmatpush2.bf16.msra.mxu0 0
    %1168 = vmatprep.subr.bf16.mxu0 0
    %1169 = vmatpush2.bf16.msra.mxu0 0
    %1170 = vmatprep.subr.bf16.mxu0 0
    %1171 = vmatpush2.bf16.msra.mxu0 0
    %1172 = vmatprep.subr.bf16.mxu0 0
    %1173 = vmatpush2.bf16.msra.mxu0 0
    %1174 = vmatprep.mubr.bf16.mxu0 0
    %1175 = vmatmul.mubr.bf16.gmra.mxu0 %v1132
    %v1176 = vpop.f32.mrf.mxu0
    %v1177 = vadd.f32 0.0, %v1176
    %v1178 = vpop.f32.mrf.mxu0
    %v1179 = vpop.f32.mrf.mxu0
    %v1180 = vpop.f32.mrf.mxu0
    %1181 = vdwg.mxu0
    %v1182 = vadd.f32 %v1133, %v1177
    %1183 = vst [vmem:[#allocation2] sm:$0xff] %v1182
    // Predicated region
    $region86: #{tpu_custom_call.1} parent=1 // pred_check
      %p1184 = pneg %p141
    $region87: #{tpu_custom_call.1} parent=1 // pred_check_branch
      %1186 = sbr.rel (%p1184) target = $region89
    $region88: #{tpu_custom_call.1} parent=1 // pred_region
      %v1187 = vld [vmem:[#allocation2] sm:$0xff]
      %v1188 = vpack.c.bf16 %v1187, %v1187
      %v1189 = vld [vmem:[#allocation12] sm:$0xf]
      %v1190 = vld [vmem:[#allocation12 + $0x4] sm:$0xf]
      %v1191 = vld [vmem:[#allocation12 + $0x8] sm:$0xf]
      %v1192 = vld [vmem:[#allocation12 + $0xc] sm:$0xf]
      %v1193 = vld [vmem:[#allocation12 + $0x10] sm:$0xf]
      %v1194 = vld [vmem:[#allocation12 + $0x14] sm:$0xf]
      %v1195 = vld [vmem:[#allocation12 + $0x18] sm:$0xf]
      %v1196 = vld [vmem:[#allocation12 + $0x1c] sm:$0xf]
      %v1197 = vld [vmem:[#allocation12 + $0x20] sm:$0xf]
      %v1198 = vld [vmem:[#allocation12 + $0x24] sm:$0xf]
      %v1199 = vld [vmem:[#allocation12 + $0x28] sm:$0xf]
      %v1200 = vld [vmem:[#allocation12 + $0x2c] sm:$0xf]
      %v1201 = vld [vmem:[#allocation12 + $0x30] sm:$0xf]
      %v1202 = vld [vmem:[#allocation12 + $0x34] sm:$0xf]
      %v1203 = vld [vmem:[#allocation12 + $0x38] sm:$0xf]
      %v1204 = vld [vmem:[#allocation12 + $0x3c] sm:$0xf]
      %v1205 = vld [vmem:[%s10] sm:$0x1]
      %v1207 = vlaneseq
      %v1208 = vshrl.u32 %v1207, 7
      %v1209 = vsub.s32 0, %v1208
      %v1210 = vrot.slane %v1205, %v1209
      %v1228 = vunpack.c.l.b16 %v1189
      %v1229 = vunpack.c.l.b16 %v1190
      %v1230 = vunpack.c.l.b16 %v1191
      %v1231 = vunpack.c.l.b16 %v1192
      %v1232 = vunpack.c.l.b16 %v1193
      %v1233 = vunpack.c.l.b16 %v1194
      %v1234 = vunpack.c.l.b16 %v1195
      %v1235 = vunpack.c.l.b16 %v1196
      %v1236 = vunpack.c.l.b16 %v1197
      %v1237 = vunpack.c.l.b16 %v1198
      %v1238 = vunpack.c.l.b16 %v1199
      %v1239 = vunpack.c.l.b16 %v1200
      %v1240 = vunpack.c.l.b16 %v1201
      %v1241 = vunpack.c.l.b16 %v1202
      %v1242 = vunpack.c.l.b16 %v1203
      %v1243 = vunpack.c.l.b16 %v1204
      %v1244 = vpack.c.b16 %v1229, %v1228
      %v1245 = vpack.c.b16 %v1231, %v1230
      %v1246 = vpack.c.b16 %v1233, %v1232
      %v1247 = vpack.c.b16 %v1235, %v1234
      %v1248 = vpack.c.b16 %v1237, %v1236
      %v1249 = vpack.c.b16 %v1239, %v1238
      %v1250 = vpack.c.b16 %v1241, %v1240
      %v1251 = vpack.c.b16 %v1243, %v1242
      %1260 = vmatprep.subr.bf16.mxu0 0
      %1261 = vmatpush1.bf16.msra.mxu0 %v1251
      %1262 = vmatprep.subr.bf16.mxu0 0
      %1263 = vmatpush1.bf16.msra.mxu0 %v1250
      %1264 = vmatprep.subr.bf16.mxu0 0
      %1265 = vmatpush1.bf16.msra.mxu0 %v1249
      %1266 = vmatprep.subr.bf16.mxu0 0
      %1267 = vmatpush1.bf16.msra.mxu0 %v1248
      %1268 = vmatprep.subr.bf16.mxu0 0
      %1269 = vmatpush1.bf16.msra.mxu0 %v1247
      %1270 = vmatprep.subr.bf16.mxu0 0
      %1271 = vmatpush1.bf16.msra.mxu0 %v1246
      %1272 = vmatprep.subr.bf16.mxu0 0
      %1273 = vmatpush1.bf16.msra.mxu0 %v1245
      %1274 = vmatprep.subr.bf16.mxu0 0
      %1275 = vmatpush1.bf16.msra.mxu0 %v1244
      %1276 = vmatprep.subr.bf16.mxu0 0
      %1277 = vmatpush2.bf16.msra.mxu0 0
      %1278 = vmatprep.subr.bf16.mxu0 0
      %1279 = vmatpush2.bf16.msra.mxu0 0
      %1280 = vmatprep.subr.bf16.mxu0 0
      %1281 = vmatpush2.bf16.msra.mxu0 0
      %1282 = vmatprep.subr.bf16.mxu0 0
      %1283 = vmatpush2.bf16.msra.mxu0 0
      %1284 = vmatprep.subr.bf16.mxu0 0
      %1285 = vmatpush2.bf16.msra.mxu0 0
      %1286 = vmatprep.subr.bf16.mxu0 0
      %1287 = vmatpush2.bf16.msra.mxu0 0
      %1288 = vmatprep.subr.bf16.mxu0 0
      %1289 = vmatpush2.bf16.msra.mxu0 0
      %1290 = vmatprep.subr.bf16.mxu0 0
      %1291 = vmatpush2.bf16.msra.mxu0 0
      %1292 = vmatprep.mubr.bf16.mxu0 0
      %1293 = vmatmul.mubr.bf16.gmra.mxu0 %v1188
      %v1294 = vpop.f32.mrf.mxu0
      %v1295 = vadd.f32 %v1210, %v1294
      %v1296 = vpop.f32.mrf.mxu0
      %v1297 = vpop.f32.mrf.mxu0
      %v1298 = vpop.f32.mrf.mxu0
      %1299 = vdwg.mxu0
      %v1300 = vmax.f32 %v1295, 0.0
      %v1301 = vand.u32 2147483647, %v1295
      %v1302 = vsub.f32 0.0, %v1301
      %v1303 = vmul.f32 %v1302, 1.442695
      %v1304 = vpow.pop %v1303
      %v1305 = vadd.f32 %v1304, 1.0
      %v1306 = vlog2.pop %v1305
      %v1307 = vmul.f32 %v1306, 0.6931472
      %v1308 = vadd.f32 %v1300, %v1307
      %v1309 = vsub.f32 %v1308, 0.6931472
      %v1310 = vmul.f32 %v1309, 0.25
      %v1311 = vpack.c.bf16 %v1310, %v1310
      %v1312 = vld [vmem:[#allocation14] sm:$0xf]
      %v1313 = vld [vmem:[#allocation14 + $0x4] sm:$0xf]
      %v1314 = vld [vmem:[#allocation14 + $0x8] sm:$0xf]
      %v1315 = vld [vmem:[#allocation14 + $0xc] sm:$0xf]
      %v1316 = vld [vmem:[#allocation14 + $0x10] sm:$0xf]
      %v1317 = vld [vmem:[#allocation14 + $0x14] sm:$0xf]
      %v1318 = vld [vmem:[#allocation14 + $0x18] sm:$0xf]
      %v1319 = vld [vmem:[#allocation14 + $0x1c] sm:$0xf]
      %v1320 = vld [vmem:[#allocation14 + $0x20] sm:$0xf]
      %v1321 = vld [vmem:[#allocation14 + $0x24] sm:$0xf]
      %v1322 = vld [vmem:[#allocation14 + $0x28] sm:$0xf]
      %v1323 = vld [vmem:[#allocation14 + $0x2c] sm:$0xf]
      %v1324 = vld [vmem:[#allocation14 + $0x30] sm:$0xf]
      %v1325 = vld [vmem:[#allocation14 + $0x34] sm:$0xf]
      %v1326 = vld [vmem:[#allocation14 + $0x38] sm:$0xf]
      %v1327 = vld [vmem:[#allocation14 + $0x3c] sm:$0xf]
      %v1328 = vld [vmem:[%s12] sm:$0x1]
      %v1330 = vlaneseq
      %v1331 = vshrl.u32 %v1330, 7
      %v1332 = vsub.s32 0, %v1331
      %v1333 = vrot.slane %v1328, %v1332
      %v1351 = vunpack.c.l.b16 %v1312
      %v1352 = vunpack.c.l.b16 %v1313
      %v1353 = vunpack.c.l.b16 %v1314
      %v1354 = vunpack.c.l.b16 %v1315
      %v1355 = vunpack.c.l.b16 %v1316
      %v1356 = vunpack.c.l.b16 %v1317
      %v1357 = vunpack.c.l.b16 %v1318
      %v1358 = vunpack.c.l.b16 %v1319
      %v1359 = vunpack.c.l.b16 %v1320
      %v1360 = vunpack.c.l.b16 %v1321
      %v1361 = vunpack.c.l.b16 %v1322
      %v1362 = vunpack.c.l.b16 %v1323
      %v1363 = vunpack.c.l.b16 %v1324
      %v1364 = vunpack.c.l.b16 %v1325
      %v1365 = vunpack.c.l.b16 %v1326
      %v1366 = vunpack.c.l.b16 %v1327
      %v1367 = vpack.c.b16 %v1352, %v1351
      %v1368 = vpack.c.b16 %v1354, %v1353
      %v1369 = vpack.c.b16 %v1356, %v1355
      %v1370 = vpack.c.b16 %v1358, %v1357
      %v1371 = vpack.c.b16 %v1360, %v1359
      %v1372 = vpack.c.b16 %v1362, %v1361
      %v1373 = vpack.c.b16 %v1364, %v1363
      %v1374 = vpack.c.b16 %v1366, %v1365
      %1383 = vmatprep.subr.bf16.mxu0 0
      %1384 = vmatpush1.bf16.msra.mxu0 %v1374
      %1385 = vmatprep.subr.bf16.mxu0 0
      %1386 = vmatpush1.bf16.msra.mxu0 %v1373
      %1387 = vmatprep.subr.bf16.mxu0 0
      %1388 = vmatpush1.bf16.msra.mxu0 %v1372
      %1389 = vmatprep.subr.bf16.mxu0 0
      %1390 = vmatpush1.bf16.msra.mxu0 %v1371
      %1391 = vmatprep.subr.bf16.mxu0 0
      %1392 = vmatpush1.bf16.msra.mxu0 %v1370
      %1393 = vmatprep.subr.bf16.mxu0 0
      %1394 = vmatpush1.bf16.msra.mxu0 %v1369
      %1395 = vmatprep.subr.bf16.mxu0 0
      %1396 = vmatpush1.bf16.msra.mxu0 %v1368
      %1397 = vmatprep.subr.bf16.mxu0 0
      %1398 = vmatpush1.bf16.msra.mxu0 %v1367
      %1399 = vmatprep.subr.bf16.mxu0 0
      %1400 = vmatpush2.bf16.msra.mxu0 0
      %1401 = vmatprep.subr.bf16.mxu0 0
      %1402 = vmatpush2.bf16.msra.mxu0 0
      %1403 = vmatprep.subr.bf16.mxu0 0
      %1404 = vmatpush2.bf16.msra.mxu0 0
      %1405 = vmatprep.subr.bf16.mxu0 0
      %1406 = vmatpush2.bf16.msra.mxu0 0
      %1407 = vmatprep.subr.bf16.mxu0 0
      %1408 = vmatpush2.bf16.msra.mxu0 0
      %1409 = vmatprep.subr.bf16.mxu0 0
      %1410 = vmatpush2.bf16.msra.mxu0 0
      %1411 = vmatprep.subr.bf16.mxu0 0
      %1412 = vmatpush2.bf16.msra.mxu0 0
      %1413 = vmatprep.subr.bf16.mxu0 0
      %1414 = vmatpush2.bf16.msra.mxu0 0
      %1415 = vmatprep.mubr.bf16.mxu0 0
      %1416 = vmatmul.mubr.bf16.gmra.mxu0 %v1311
      %v1417 = vpop.f32.mrf.mxu0
      %v1418 = vadd.f32 %v1333, %v1417
      %v1419 = vpop.f32.mrf.mxu0
      %v1420 = vpop.f32.mrf.mxu0
      %v1421 = vpop.f32.mrf.mxu0
      %1422 = vdwg.mxu0
      %1423 = vst [vmem:[#allocation15] sm:$0xff] %v1418
    $region89: #{tpu_custom_call.1} parent=1 // pred_fallthru
      _
    // Predicated region
    $region90: #{tpu_custom_call.1} parent=1 // pred_check
      _
    $region91: #{tpu_custom_call.1} parent=1 // pred_check_branch
      %1425 = sbr.rel (0) target = $region93
    $region92: #{tpu_custom_call.1} parent=1 // pred_region
      %s1427 = ssub.s32 128, 128
      %1428 = vsyncadd [#allocation5], %s1427
      %s1430 = sshll.u32 [#allocation15], 4
      %s1431 = int_to_ptr.vmem [resolvable:$true] %s1430
      %1433 = dma.vmem_to_hbm [thread:$0]  %s1431, 128, %s13, [#allocation5]
    $region93: #{tpu_custom_call.1} parent=1 // pred_fallthru
      _
    // Predicated region
    $region94: #{tpu_custom_call.1} parent=1 // pred_check
      _
    $region95: #{tpu_custom_call.1} parent=1 // pred_check_branch
      %1435 = sbr.rel (0) target = $region97
    $region96: #{tpu_custom_call.1} parent=1 // pred_region
      %1436 = dma.done [#allocation5], 128
    $region97: #{tpu_custom_call.1} parent=1 // pred_fallthru
      _
    %1437 = vsyncpa [#allocation4], 1
    %1438 = vsyncpa [#allocation7], 1
    %1439 = vsyncpa [#allocation10], 1
    %1440 = vsyncpa [#allocation13], 1
    %1441 = vsyncpa [#allocation5], 1

</llo_original>
